<compile_context>
chip_gen: v7x
topology: tpu7x:2x2x1
jax: 0.10.0
libtpu: 0.0.40
codegen_flags: <defaults>
</compile_context>

<pallas_src>
import functools
import math

import jax
import jax.numpy as jnp
from jax.experimental import pallas as pl
from jax.experimental.pallas import tpu as pltpu

LANE = 128          # lane width: last dims of all MXU operands padded to this
SUBLANE_BF16 = 16   # bf16 packs 2 rows per sublane -> native (16, 128) tile


def _round_up(x, m):
    return (x + m - 1) // m * m


def fused_sage_kernel(*refs, n_layers, dst_pad, f_in_pad, project_first, cat_slot):
    """refs = (x, a[0..L-1], invdeg[0..L-1], w[0..L-1], b[0..L-1], out,
               h_scratch[0..L-2], cat_scratch[...]).

    a[l]:      (dst_pad[l], src_pad[l])       bf16 exact 0/1 sampled adjacency (zero padded)
    invdeg[l]: (dst_pad[l], 1)                f32  1 / max(deg, 1)
    w[l]:      (2*F_in_pad[l], F_out_pad[l])  bf16 stacked [W_self ; W_neigh]
    b[l]:      (1, F_out_pad[l])              f32
    """
    x_ref = refs[0]
    a_refs = refs[1:1 + n_layers]
    invdeg_refs = refs[1 + n_layers:1 + 2 * n_layers]
    w_refs = refs[1 + 2 * n_layers:1 + 3 * n_layers]
    b_refs = refs[1 + 3 * n_layers:1 + 4 * n_layers]
    out_ref = refs[1 + 4 * n_layers]
    scratch = refs[2 + 4 * n_layers:]
    h_scratch = scratch[:n_layers - 1]
    cat_scratch = scratch[n_layers - 1:]

    h_ref = x_ref                                  # bf16, (src_pad[0], F_pad[0])
    for l in range(n_layers):
        d = dst_pad[l]
        fi = f_in_pad[l]
        inv_deg = invdeg_refs[l][...]              # (d, 1) f32

        if project_first[l]:
            # Path B (cheaper when F_out < F_in and src >> dst): project then aggregate.
            w_neigh = w_refs[l][fi:2 * fi, :]      # static ref slice: free
            p = jnp.dot(h_ref[...], w_neigh, preferred_element_type=jnp.float32)
            neigh = jnp.dot(a_refs[l][...], p.astype(jnp.bfloat16),
                            preferred_element_type=jnp.float32) * inv_deg
            w_self = w_refs[l][0:fi, :]
            out = jnp.dot(h_ref[0:d, :], w_self, preferred_element_type=jnp.float32)
            out = out + neigh + b_refs[l][...]
        else:
            # Path A: aggregate first, one stacked K=2*F_in MXU pass via persistent cat
            # scratch (no jnp.concatenate temp). MXU gives the neighbor SUM; the mean's
            # 1/deg stays in f32 on the VPU.
            neigh = jnp.dot(a_refs[l][...], h_ref[...],
                            preferred_element_type=jnp.float32) * inv_deg
            cref = cat_scratch[cat_slot[l]]        # (d, 2*fi) bf16
            cref[:, 0:fi] = h_ref[0:d, :]          # h_dst: 16-row / 128-lane aligned store
            cref[:, fi:2 * fi] = neigh.astype(jnp.bfloat16)
            out = jnp.dot(cref[...], w_refs[l][...], preferred_element_type=jnp.float32)
            out = out + b_refs[l][...]

        if l != n_layers - 1:
            out = jnp.maximum(out, 0.0)            # relu; dropout = identity (eval)
            # Padded dst rows hold relu(bias) junk; harmless only because the next layer's
            # A columns for those rows are exactly zero (invariant asserted in the wrapper).
            h_scratch[l][...] = out.astype(jnp.bfloat16)
            h_ref = h_scratch[l]                   # next layer's h_src stays in VMEM
        else:
            out_ref[...] = out.astype(out_ref.dtype)   # lane-dense f32 store


def sage_forward(blocks, x, params):
    """Fused GraphSAGE forward.

    blocks: list of L sampled 0/1 adjacency blocks, blocks[l]: (num_dst[l], num_src[l]) f32
    x:      (num_src[0], in_feats) f32
    params: list of L tuples (w_self (F_in,F_out), w_neigh (F_in,F_out), b (1,F_out)) f32
    """
    n_layers = len(params)
    assert len(blocks) == n_layers
    f_dims = [x.shape[1]] + [w_self.shape[1] for (w_self, _, _) in params]
    f_pad = [_round_up(f, LANE) for f in f_dims]

    # Node counts per level: lvl[0]=src of layer 0, lvl[l+1]=dst of layer l (=src of layer l+1).
    lvl = [blocks[0].shape[1]] + [a.shape[0] for a in blocks]
    for l in range(n_layers):
        assert blocks[l].shape[1] == lvl[l], \
            "block l src nodes must equal block l-1 dst nodes (DGL block chaining)"
    # Levels 0..L-1 are contraction dims (A's last dim / h's rows): pad to 128 lanes.
    # Final level is only the output row count: 16-align (bf16 A row tile).
    lvl_pad = [_round_up(n, LANE) for n in lvl[:-1]] + [_round_up(lvl[-1], SUBLANE_BF16)]
    src_pad = lvl_pad[:-1]
    dst_pad = lvl_pad[1:]

    # ---- wrapper-side layout plumbing: zero-pad, cast MXU operands to bf16 ----
    x_p = jnp.zeros((src_pad[0], f_pad[0]), jnp.bfloat16)
    x_p = x_p.at[:lvl[0], :f_dims[0]].set(x.astype(jnp.bfloat16))

    a_p, invdeg_p, w_p, b_p = [], [], [], []
    for l in range(n_layers):
        a = blocks[l]
        w_self, w_neigh, b = params[l]
        f_in, f_out = w_self.shape
        d, s = a.shape
        # Exact 0/1 adjacency in bf16; padding is exactly zero (correctness invariant).
        ap = jnp.zeros((dst_pad[l], src_pad[l]), jnp.bfloat16)
        ap = ap.at[:d, :s].set(a.astype(jnp.bfloat16))
        a_p.append(ap)
        # f32 reciprocal degree (mean normalization stays in f32, applied after the MXU sum).
        deg = jnp.maximum(jnp.sum(a, axis=1, keepdims=True), 1.0)
        idp = jnp.zeros((dst_pad[l], 1), jnp.float32)
        idp = idp.at[:d, :].set((1.0 / deg).astype(jnp.float32))
        invdeg_p.append(idp)
        # Stack [W_self ; W_neigh] once -> one stacked MXU pass per aggregate-first layer.
        wp = jnp.zeros((2 * f_pad[l], f_pad[l + 1]), jnp.bfloat16)
        wp = wp.at[:f_in, :f_out].set(w_self.astype(jnp.bfloat16))
        wp = wp.at[f_pad[l]:f_pad[l] + f_in, :f_out].set(w_neigh.astype(jnp.bfloat16))
        w_p.append(wp)
        bp = jnp.zeros((1, f_pad[l + 1]), jnp.float32)
        bp = bp.at[:, :f_out].set(jnp.reshape(b, (1, f_out)).astype(jnp.float32))
        b_p.append(bp)

    # ---- static per-layer choice: aggregate-first (stacked K=2F_in) vs project-first ----
    project_first = []
    for l in range(n_layers):
        d, s, fi, fo = dst_pad[l], src_pad[l], f_pad[l], f_pad[l + 1]
        cost_agg_first = d * s * fi + d * (2 * fi) * fo
        cost_proj_first = s * fi * fo + d * s * fo + d * fi * fo
        project_first.append(cost_proj_first < cost_agg_first)

    # ---- scratch: intermediate activations (bf16) + per-layer cat buffers (path A only) ----
    scratch_shapes = [pltpu.VMEM((dst_pad[l], f_pad[l + 1]), jnp.bfloat16)
                      for l in range(n_layers - 1)]
    cat_slot, n_cat = [], 0
    for l in range(n_layers):
        if project_first[l]:
            cat_slot.append(-1)
        else:
            cat_slot.append(n_cat)
            n_cat += 1
            scratch_shapes.append(pltpu.VMEM((dst_pad[l], 2 * f_pad[l]), jnp.bfloat16))

    # ---- VMEM budget: everything is resident; size the limit explicitly ----
    def _nbytes(shape, itemsize):
        return math.prod(shape) * itemsize

    total_bytes = _nbytes((src_pad[0], f_pad[0]), 2)
    total_bytes += _nbytes((dst_pad[-1], f_pad[-1]), 4)
    for l in range(n_layers):
        total_bytes += _nbytes((dst_pad[l], src_pad[l]), 2)
        total_bytes += _nbytes((dst_pad[l], 1), 4)
        total_bytes += _nbytes((2 * f_pad[l], f_pad[l + 1]), 2)
        total_bytes += _nbytes((1, f_pad[l + 1]), 4)
        if l < n_layers - 1:
            total_bytes += _nbytes((dst_pad[l], f_pad[l + 1]), 2)
        if not project_first[l]:
            total_bytes += _nbytes((dst_pad[l], 2 * f_pad[l]), 2)
    assert total_bytes <= (48 << 20), \
        "resident footprint too large for v7x VMEM; tile dst/src axes (see TODO(synk))"
    vmem_limit = int(min(96 << 20, max(2 * total_bytes + (4 << 20), 32 << 20)))

    kernel = functools.partial(
        fused_sage_kernel, n_layers=n_layers, dst_pad=tuple(dst_pad),
        f_in_pad=tuple(f_pad[:-1]), project_first=tuple(project_first),
        cat_slot=tuple(cat_slot))
    vmem = pl.BlockSpec(memory_space=pltpu.MemorySpace.VMEM)
    out_p = pl.pallas_call(
        kernel,
        out_shape=jax.ShapeDtypeStruct((dst_pad[-1], f_pad[-1]), jnp.float32),
        in_specs=[vmem] * (1 + 4 * n_layers),
        out_specs=vmem,
        scratch_shapes=scratch_shapes,
        compiler_params=pltpu.CompilerParams(vmem_limit_bytes=vmem_limit),
    )(x_p, *a_p, *invdeg_p, *w_p, *b_p)
    return out_p[:lvl[-1], :f_dims[-1]]


# ----------------------------- pure-JAX reference & test data -----------------------------

def sage_reference(blocks, x, params):
    h = x
    n_layers = len(params)
    for l, (a, (w_self, w_neigh, b)) in enumerate(zip(blocks, params)):
        num_dst = a.shape[0]
        deg = jnp.maximum(jnp.sum(a, axis=1, keepdims=True), 1.0)
        neigh = (a @ h) / deg                     # mean over sampled neighbors
        h = h[:num_dst] @ w_self + neigh @ w_neigh + b
        if l != n_layers - 1:
            h = jax.nn.relu(h)                    # dropout = identity in eval mode
    return h


def make_block(key, num_dst, num_src):
    """Random sampled bipartite block as an exact 0/1 adjacency ('mean' over sampled nbrs).

    No forced self-edge: SAGEConv('mean') aggregates only sampled neighbors; the self
    contribution comes solely from fc_self. Zero-degree rows aggregate to 0 (deg clamp).
    """
    return jax.random.bernoulli(key, p=0.3, shape=(num_dst, num_src)).astype(jnp.float32)


def init_params(key, in_feats, n_hidden, n_classes, n_layers):
    dims = [in_feats] + [n_hidden] * (n_layers - 1) + [n_classes]
    params = []
    for l in range(n_layers):
        f_in, f_out = dims[l], dims[l + 1]
        key, k1, k2, k3 = jax.random.split(key, 4)
        scale = 1.0 / jnp.sqrt(jnp.float32(f_in))
        w_self = jax.random.normal(k1, (f_in, f_out), jnp.float32) * scale
        w_neigh = jax.random.normal(k2, (f_in, f_out), jnp.float32) * scale
        b = jax.random.normal(k3, (1, f_out), jnp.float32) * 0.1
        params.append((w_self, w_neigh, b))
    return params


if __name__ == "__main__":
    key = jax.random.PRNGKey(0)

    # Small, deliberately non-aligned shapes (exercise lane/sublane padding and both the
    # project-first layer-0 path and the stacked aggregate-first path on layers 1..2).
    in_feats, n_hidden, n_classes, n_layers = 200, 64, 16, 3
    src_counts = [160, 130, 40]   # neighbor-sampled blocks shrink toward the output nodes
    dst_counts = [130, 40, 8]

    key, kx = jax.random.split(key)
    x = jax.random.normal(kx, (src_counts[0], in_feats), jnp.float32)

    blocks = []
    for l in range(n_layers):
        key, kb = jax.random.split(key)
        blocks.append(make_block(kb, dst_counts[l], src_counts[l]))

    key, kp = jax.random.split(key)
    params = init_params(kp, in_feats, n_hidden, n_classes, n_layers)

    out = jax.jit(sage_forward)(blocks, x, params)
    out = jax.block_until_ready(out)
    assert out.shape == (dst_counts[-1], n_classes), out.shape

    # Correctness vs f32 reference (MXU operands bf16, f32 accumulation, f32 mean/bias).
    ref = sage_reference(blocks, x, params)
    max_err = float(jnp.max(jnp.abs(out - ref)))
    scale = float(jnp.max(jnp.abs(ref))) + 1e-6
    assert max_err / scale < 0.05, f"normalized max err {max_err / scale:.4f}"
    print("KERNEL_OK")
</pallas_src>

<mosaic_0001>
module attributes {stable_mosaic.version = 11 : i64} {
  func.func @fused_sage_kernel(%arg0: memref<256x256xbf16, #tpu.memory_space<vmem>>, %arg1: memref<256x256xbf16, #tpu.memory_space<vmem>>, %arg2: memref<128x256xbf16, #tpu.memory_space<vmem>>, %arg3: memref<16x128xbf16, #tpu.memory_space<vmem>>, %arg4: memref<256x1xf32, #tpu.memory_space<vmem>>, %arg5: memref<128x1xf32, #tpu.memory_space<vmem>>, %arg6: memref<16x1xf32, #tpu.memory_space<vmem>>, %arg7: memref<512x128xbf16, #tpu.memory_space<vmem>>, %arg8: memref<256x128xbf16, #tpu.memory_space<vmem>>, %arg9: memref<256x128xbf16, #tpu.memory_space<vmem>>, %arg10: memref<1x128xf32, #tpu.memory_space<vmem>>, %arg11: memref<1x128xf32, #tpu.memory_space<vmem>>, %arg12: memref<1x128xf32, #tpu.memory_space<vmem>>, %arg13: memref<16x128xf32, #tpu.memory_space<vmem>>, %arg14: memref<256x128xbf16, #tpu.memory_space<vmem>>, %arg15: memref<128x128xbf16, #tpu.memory_space<vmem>>, %arg16: memref<128x256xbf16, #tpu.memory_space<vmem>>, %arg17: memref<16x256xbf16, #tpu.memory_space<vmem>>) attributes {dimension_semantics = [], scalar_prefetch = 0 : i64, scratch_operands = 4 : i64, tpu.core_type = #tpu.core_type<tc>} {
    %c0 = arith.constant 0 : index
    %c0_0 = arith.constant 0 : index
    %0 = vector.load %arg4[%c0, %c0_0] : memref<256x1xf32, #tpu.memory_space<vmem>>, vector<256x1xf32>
    %c256 = arith.constant 256 : index
    %c0_1 = arith.constant 0 : index
    %1 = vector.load %arg7[%c256, %c0_1] : memref<512x128xbf16, #tpu.memory_space<vmem>>, vector<256x128xbf16>
    %c0_2 = arith.constant 0 : index
    %c0_3 = arith.constant 0 : index
    %2 = vector.load %arg0[%c0_2, %c0_3] : memref<256x256xbf16, #tpu.memory_space<vmem>>, vector<256x256xbf16>
    %cst = arith.constant dense<0.000000e+00> : vector<256x128xf32>
    %3 = tpu.matmul %2, %1, %cst {dimension_numbers = #tpu.dot_dimension_numbers<[1], [0], [0], [1], [0, 0, 1, 1], [], []>} : vector<256x256xbf16>, vector<256x128xbf16>, vector<256x128xf32> -> vector<256x128xf32>
    %c0_4 = arith.constant 0 : index
    %c0_5 = arith.constant 0 : index
    %4 = vector.load %arg1[%c0_4, %c0_5] : memref<256x256xbf16, #tpu.memory_space<vmem>>, vector<256x256xbf16>
    %5 = arith.truncf %3 : vector<256x128xf32> to vector<256x128xbf16>
    %cst_6 = arith.constant dense<0.000000e+00> : vector<256x128xf32>
    %6 = tpu.matmul %4, %5, %cst_6 {dimension_numbers = #tpu.dot_dimension_numbers<[1], [0], [0], [1], [0, 0, 1, 1], [], []>} : vector<256x256xbf16>, vector<256x128xbf16>, vector<256x128xf32> -> vector<256x128xf32>
    %7 = vector.broadcast %0 : vector<256x1xf32> to vector<256x128xf32>
    %8 = arith.mulf %6, %7 : vector<256x128xf32>
    %c0_7 = arith.constant 0 : index
    %c0_8 = arith.constant 0 : index
    %9 = vector.load %arg7[%c0_7, %c0_8] : memref<512x128xbf16, #tpu.memory_space<vmem>>, vector<256x128xbf16>
    %c0_9 = arith.constant 0 : index
    %c0_10 = arith.constant 0 : index
    %10 = vector.load %arg0[%c0_9, %c0_10] : memref<256x256xbf16, #tpu.memory_space<vmem>>, vector<256x256xbf16>
    %cst_11 = arith.constant dense<0.000000e+00> : vector<256x128xf32>
    %11 = tpu.matmul %10, %9, %cst_11 {dimension_numbers = #tpu.dot_dimension_numbers<[1], [0], [0], [1], [0, 0, 1, 1], [], []>} : vector<256x256xbf16>, vector<256x128xbf16>, vector<256x128xf32> -> vector<256x128xf32>
    %12 = arith.addf %11, %8 : vector<256x128xf32>
    %c0_12 = arith.constant 0 : index
    %c0_13 = arith.constant 0 : index
    %13 = vector.load %arg10[%c0_12, %c0_13] : memref<1x128xf32, #tpu.memory_space<vmem>>, vector<1x128xf32>
    %14 = vector.broadcast %13 : vector<1x128xf32> to vector<256x128xf32>
    %15 = arith.addf %12, %14 : vector<256x128xf32>
    %cst_14 = arith.constant 0.000000e+00 : f32
    %16 = vector.broadcast %cst_14 : f32 to vector<256x128xf32>
    %17 = arith.maximumf %15, %16 : vector<256x128xf32>
    %18 = arith.truncf %17 : vector<256x128xf32> to vector<256x128xbf16>
    %c0_15 = arith.constant 0 : index
    %c0_16 = arith.constant 0 : index
    %19 = vector.load %arg14[%c0_15, %c0_16] : memref<256x128xbf16, #tpu.memory_space<vmem>>, vector<256x128xbf16>
    tpu.vector_store %arg14[%c0_15, %c0_16], %18 {strides = array<i32>} : memref<256x128xbf16, #tpu.memory_space<vmem>>, vector<256x128xbf16>,
    %c0_17 = arith.constant 0 : index
    %c0_18 = arith.constant 0 : index
    %20 = vector.load %arg5[%c0_17, %c0_18] : memref<128x1xf32, #tpu.memory_space<vmem>>, vector<128x1xf32>
    %c0_19 = arith.constant 0 : index
    %c0_20 = arith.constant 0 : index
    %21 = vector.load %arg2[%c0_19, %c0_20] : memref<128x256xbf16, #tpu.memory_space<vmem>>, vector<128x256xbf16>
    %c0_21 = arith.constant 0 : index
    %c0_22 = arith.constant 0 : index
    %22 = vector.load %arg14[%c0_21, %c0_22] : memref<256x128xbf16, #tpu.memory_space<vmem>>, vector<256x128xbf16>
    %cst_23 = arith.constant dense<0.000000e+00> : vector<128x128xf32>
    %23 = tpu.matmul %21, %22, %cst_23 {dimension_numbers = #tpu.dot_dimension_numbers<[1], [0], [0], [1], [0, 0, 1, 1], [], []>} : vector<128x256xbf16>, vector<256x128xbf16>, vector<128x128xf32> -> vector<128x128xf32>
    %24 = vector.broadcast %20 : vector<128x1xf32> to vector<128x128xf32>
    %25 = arith.mulf %23, %24 : vector<128x128xf32>
    %c0_24 = arith.constant 0 : index
    %c0_25 = arith.constant 0 : index
    %26 = vector.load %arg14[%c0_24, %c0_25] : memref<256x128xbf16, #tpu.memory_space<vmem>>, vector<128x128xbf16>
    %c0_26 = arith.constant 0 : index
    %c0_27 = arith.constant 0 : index
    %27 = vector.load %arg16[%c0_26, %c0_27] : memref<128x256xbf16, #tpu.memory_space<vmem>>, vector<128x128xbf16>
    tpu.vector_store %arg16[%c0_26, %c0_27], %26 {strides = array<i32>} : memref<128x256xbf16, #tpu.memory_space<vmem>>, vector<128x128xbf16>,
    %28 = arith.truncf %25 : vector<128x128xf32> to vector<128x128xbf16>
    %c0_28 = arith.constant 0 : index
    %c128 = arith.constant 128 : index
    %29 = vector.load %arg16[%c0_28, %c128] : memref<128x256xbf16, #tpu.memory_space<vmem>>, vector<128x128xbf16>
    tpu.vector_store %arg16[%c0_28, %c128], %28 {strides = array<i32>} : memref<128x256xbf16, #tpu.memory_space<vmem>>, vector<128x128xbf16>,
    %c0_29 = arith.constant 0 : index
    %c0_30 = arith.constant 0 : index
    %30 = vector.load %arg16[%c0_29, %c0_30] : memref<128x256xbf16, #tpu.memory_space<vmem>>, vector<128x256xbf16>
    %c0_31 = arith.constant 0 : index
    %c0_32 = arith.constant 0 : index
    %31 = vector.load %arg8[%c0_31, %c0_32] : memref<256x128xbf16, #tpu.memory_space<vmem>>, vector<256x128xbf16>
    %cst_33 = arith.constant dense<0.000000e+00> : vector<128x128xf32>
    %32 = tpu.matmul %30, %31, %cst_33 {dimension_numbers = #tpu.dot_dimension_numbers<[1], [0], [0], [1], [0, 0, 1, 1], [], []>} : vector<128x256xbf16>, vector<256x128xbf16>, vector<128x128xf32> -> vector<128x128xf32>
    %c0_34 = arith.constant 0 : index
    %c0_35 = arith.constant 0 : index
    %33 = vector.load %arg11[%c0_34, %c0_35] : memref<1x128xf32, #tpu.memory_space<vmem>>, vector<1x128xf32>
    %34 = vector.broadcast %33 : vector<1x128xf32> to vector<128x128xf32>
    %35 = arith.addf %32, %34 : vector<128x128xf32>
    %cst_36 = arith.constant 0.000000e+00 : f32
    %36 = vector.broadcast %cst_36 : f32 to vector<128x128xf32>
    %37 = arith.maximumf %35, %36 : vector<128x128xf32>
    %38 = arith.truncf %37 : vector<128x128xf32> to vector<128x128xbf16>
    %c0_37 = arith.constant 0 : index
    %c0_38 = arith.constant 0 : index
    %39 = vector.load %arg15[%c0_37, %c0_38] : memref<128x128xbf16, #tpu.memory_space<vmem>>, vector<128x128xbf16>
    tpu.vector_store %arg15[%c0_37, %c0_38], %38 {strides = array<i32>} : memref<128x128xbf16, #tpu.memory_space<vmem>>, vector<128x128xbf16>,
    %c0_39 = arith.constant 0 : index
    %c0_40 = arith.constant 0 : index
    %40 = vector.load %arg6[%c0_39, %c0_40] : memref<16x1xf32, #tpu.memory_space<vmem>>, vector<16x1xf32>
    %c0_41 = arith.constant 0 : index
    %c0_42 = arith.constant 0 : index
    %41 = vector.load %arg3[%c0_41, %c0_42] : memref<16x128xbf16, #tpu.memory_space<vmem>>, vector<16x128xbf16>
    %c0_43 = arith.constant 0 : index
    %c0_44 = arith.constant 0 : index
    %42 = vector.load %arg15[%c0_43, %c0_44] : memref<128x128xbf16, #tpu.memory_space<vmem>>, vector<128x128xbf16>
    %cst_45 = arith.constant dense<0.000000e+00> : vector<16x128xf32>
    %43 = tpu.matmul %41, %42, %cst_45 {dimension_numbers = #tpu.dot_dimension_numbers<[1], [0], [0], [1], [0, 0, 1, 1], [], []>} : vector<16x128xbf16>, vector<128x128xbf16>, vector<16x128xf32> -> vector<16x128xf32>
    %44 = vector.broadcast %40 : vector<16x1xf32> to vector<16x128xf32>
    %45 = arith.mulf %43, %44 : vector<16x128xf32>
    %c0_46 = arith.constant 0 : index
    %c0_47 = arith.constant 0 : index
    %46 = vector.load %arg15[%c0_46, %c0_47] : memref<128x128xbf16, #tpu.memory_space<vmem>>, vector<16x128xbf16>
    %c0_48 = arith.constant 0 : index
    %c0_49 = arith.constant 0 : index
    %47 = vector.load %arg17[%c0_48, %c0_49] : memref<16x256xbf16, #tpu.memory_space<vmem>>, vector<16x128xbf16>
    tpu.vector_store %arg17[%c0_48, %c0_49], %46 {strides = array<i32>} : memref<16x256xbf16, #tpu.memory_space<vmem>>, vector<16x128xbf16>,
    %48 = arith.truncf %45 : vector<16x128xf32> to vector<16x128xbf16>
    %c0_50 = arith.constant 0 : index
    %c128_51 = arith.constant 128 : index
    %49 = vector.load %arg17[%c0_50, %c128_51] : memref<16x256xbf16, #tpu.memory_space<vmem>>, vector<16x128xbf16>
    tpu.vector_store %arg17[%c0_50, %c128_51], %48 {strides = array<i32>} : memref<16x256xbf16, #tpu.memory_space<vmem>>, vector<16x128xbf16>,
    %c0_52 = arith.constant 0 : index
    %c0_53 = arith.constant 0 : index
    %50 = vector.load %arg17[%c0_52, %c0_53] : memref<16x256xbf16, #tpu.memory_space<vmem>>, vector<16x256xbf16>
    %c0_54 = arith.constant 0 : index
    %c0_55 = arith.constant 0 : index
    %51 = vector.load %arg9[%c0_54, %c0_55] : memref<256x128xbf16, #tpu.memory_space<vmem>>, vector<256x128xbf16>
    %cst_56 = arith.constant dense<0.000000e+00> : vector<16x128xf32>
    %52 = tpu.matmul %50, %51, %cst_56 {dimension_numbers = #tpu.dot_dimension_numbers<[1], [0], [0], [1], [0, 0, 1, 1], [], []>} : vector<16x256xbf16>, vector<256x128xbf16>, vector<16x128xf32> -> vector<16x128xf32>
    %c0_57 = arith.constant 0 : index
    %c0_58 = arith.constant 0 : index
    %53 = vector.load %arg12[%c0_57, %c0_58] : memref<1x128xf32, #tpu.memory_space<vmem>>, vector<1x128xf32>
    %54 = vector.broadcast %53 : vector<1x128xf32> to vector<16x128xf32>
    %55 = arith.addf %52, %54 : vector<16x128xf32>
    %c0_59 = arith.constant 0 : index
    %c0_60 = arith.constant 0 : index
    %56 = vector.load %arg13[%c0_59, %c0_60] : memref<16x128xf32, #tpu.memory_space<vmem>>, vector<16x128xf32>
    tpu.vector_store %arg13[%c0_59, %c0_60], %55 {strides = array<i32>} : memref<16x128xf32, #tpu.memory_space<vmem>>, vector<16x128xf32>,
    return
  }
}

</mosaic_0001>

<llo_original>
// kernel: sage_forward.1
$region0: #{sage_forward.1}
  #allocation0 [shape = 'u32[]', space=smem, size = 0x4, offset = 0x4, fixed_abs, tag = 'smem constant byte address 0x4 - core index']
  #allocation1 [shape = 'u32[144,128]{1,0:T(1,128)}', space=vmem, size = 0x12000, scoped, tag = 'internal scratch']
  #allocation2 [shape = 'bf16[256,128]{1,0:T(16,128)(2,1)}', space=vmem, size = 0x10000, scoped, tag = 'scratch operand']
  #allocation3 [shape = 'bf16[128,128]{1,0:T(16,128)(2,1)}', space=vmem, size = 0x8000, scoped, tag = 'scratch operand']
  #allocation4 [shape = 'bf16[128,256]{1,0:T(16,128)(2,1)}', space=vmem, size = 0x10000, scoped, tag = 'scratch operand']
  #allocation5 [shape = 'bf16[16,256]{1,0:T(16,128)(2,1)}', space=vmem, size = 0x2000, scoped, tag = 'scratch operand']
  %s0 = inlined_call_operand.vmem [shape: bf16[256,256], index: 0, kind: input, shape index: {}]
  %s1 = inlined_call_operand.vmem [shape: bf16[256,256], index: 1, kind: input, shape index: {}]
  %s2 = inlined_call_operand.vmem [shape: bf16[128,256], index: 2, kind: input, shape index: {}]
  %s3 = inlined_call_operand.vmem [shape: bf16[16,128], index: 3, kind: input, shape index: {}]
  %s4 = inlined_call_operand.vmem [shape: f32[256,1], index: 4, kind: input, shape index: {}]
  %s5 = inlined_call_operand.vmem [shape: f32[128,1], index: 5, kind: input, shape index: {}]
  %s6 = inlined_call_operand.vmem [shape: f32[16,1], index: 6, kind: input, shape index: {}]
  %s7 = inlined_call_operand.vmem [shape: bf16[512,128], index: 7, kind: input, shape index: {}]
  %s8 = inlined_call_operand.vmem [shape: bf16[256,128], index: 8, kind: input, shape index: {}]
  %s9 = inlined_call_operand.vmem [shape: bf16[256,128], index: 9, kind: input, shape index: {}]
  %s10 = inlined_call_operand.vmem [shape: f32[1,128], index: 10, kind: input, shape index: {}]
  %s11 = inlined_call_operand.vmem [shape: f32[1,128], index: 11, kind: input, shape index: {}]
  %s12 = inlined_call_operand.vmem [shape: f32[1,128], index: 12, kind: input, shape index: {}]
  %s13 = inlined_call_operand.vmem [shape: f32[16,128], index: 13, kind: output, shape index: {}]
  %s14 = sld [smem:[#allocation0]]
  $region62: #{sage_forward.1} parent=0
    _
  %s16 = ssub.s32 1, %s14
  %s17 = scalar_select 0, %s16, %s14
  // Predicated region
  $region2: #{sage_forward.1} parent=0 // pred_check
    _
  $region3: #{sage_forward.1} parent=0 // pred_check_branch
    %19 = sbr.rel (0) target = $region5
  $region4: #{sage_forward.1} parent=0 // pred_region
    _
  $region5: #{sage_forward.1} parent=0 // pred_fallthru
    _
  // Predicated region
  $region6: #{sage_forward.1} parent=0 // pred_check
    _
  $region7: #{sage_forward.1} parent=0 // pred_check_branch
    %21 = sbr.rel (0) target = $region9
  $region8: #{sage_forward.1} parent=0 // pred_region
    _
  $region9: #{sage_forward.1} parent=0 // pred_fallthru
    _
  // Predicated region
  $region10: #{sage_forward.1} parent=0 // pred_check
    _
  $region11: #{sage_forward.1} parent=0 // pred_check_branch
    %23 = sbr.rel (0) target = $region13
  $region12: #{sage_forward.1} parent=0 // pred_region
    _
  $region13: #{sage_forward.1} parent=0 // pred_fallthru
    _
  // Predicated region
  $region14: #{sage_forward.1} parent=0 // pred_check
    _
  $region15: #{sage_forward.1} parent=0 // pred_check_branch
    %25 = sbr.rel (0) target = $region17
  $region16: #{sage_forward.1} parent=0 // pred_region
    _
  $region17: #{sage_forward.1} parent=0 // pred_fallthru
    _
  // Predicated region
  $region18: #{sage_forward.1} parent=0 // pred_check
    _
  $region19: #{sage_forward.1} parent=0 // pred_check_branch
    %27 = sbr.rel (0) target = $region21
  $region20: #{sage_forward.1} parent=0 // pred_region
    _
  $region21: #{sage_forward.1} parent=0 // pred_fallthru
    _
  // Predicated region
  $region22: #{sage_forward.1} parent=0 // pred_check
    _
  $region23: #{sage_forward.1} parent=0 // pred_check_branch
    %29 = sbr.rel (0) target = $region25
  $region24: #{sage_forward.1} parent=0 // pred_region
    _
  $region25: #{sage_forward.1} parent=0 // pred_fallthru
    _
  // Predicated region
  $region26: #{sage_forward.1} parent=0 // pred_check
    _
  $region27: #{sage_forward.1} parent=0 // pred_check_branch
    %31 = sbr.rel (0) target = $region29
  $region28: #{sage_forward.1} parent=0 // pred_region
    _
  $region29: #{sage_forward.1} parent=0 // pred_fallthru
    _
  // Predicated region
  $region30: #{sage_forward.1} parent=0 // pred_check
    _
  $region31: #{sage_forward.1} parent=0 // pred_check_branch
    %33 = sbr.rel (0) target = $region33
  $region32: #{sage_forward.1} parent=0 // pred_region
    _
  $region33: #{sage_forward.1} parent=0 // pred_fallthru
    _
  // Predicated region
  $region34: #{sage_forward.1} parent=0 // pred_check
    _
  $region35: #{sage_forward.1} parent=0 // pred_check_branch
    %35 = sbr.rel (0) target = $region37
  $region36: #{sage_forward.1} parent=0 // pred_region
    _
  $region37: #{sage_forward.1} parent=0 // pred_fallthru
    _
  // Predicated region
  $region38: #{sage_forward.1} parent=0 // pred_check
    _
  $region39: #{sage_forward.1} parent=0 // pred_check_branch
    %37 = sbr.rel (0) target = $region41
  $region40: #{sage_forward.1} parent=0 // pred_region
    _
  $region41: #{sage_forward.1} parent=0 // pred_fallthru
    _
  // Predicated region
  $region42: #{sage_forward.1} parent=0 // pred_check
    _
  $region43: #{sage_forward.1} parent=0 // pred_check_branch
    %39 = sbr.rel (0) target = $region45
  $region44: #{sage_forward.1} parent=0 // pred_region
    _
  $region45: #{sage_forward.1} parent=0 // pred_fallthru
    _
  // Predicated region
  $region46: #{sage_forward.1} parent=0 // pred_check
    _
  $region47: #{sage_forward.1} parent=0 // pred_check_branch
    %41 = sbr.rel (0) target = $region49
  $region48: #{sage_forward.1} parent=0 // pred_region
    _
  $region49: #{sage_forward.1} parent=0 // pred_fallthru
    _
  // Predicated region
  $region50: #{sage_forward.1} parent=0 // pred_check
    _
  $region51: #{sage_forward.1} parent=0 // pred_check_branch
    %43 = sbr.rel (0) target = $region53
  $region52: #{sage_forward.1} parent=0 // pred_region
    _
  $region53: #{sage_forward.1} parent=0 // pred_fallthru
    _
  %v45 = vld [vmem:[%s4] sm:$0xff]
  %v46 = vld [vmem:[%s4 + $0x8] sm:$0xff]
  %v47 = vld [vmem:[%s4 + $0x10] sm:$0xff]
  %v48 = vld [vmem:[%s4 + $0x18] sm:$0xff]
  %v49 = vld [vmem:[%s4 + $0x20] sm:$0xff]
  %v50 = vld [vmem:[%s4 + $0x28] sm:$0xff]
  %v51 = vld [vmem:[%s4 + $0x30] sm:$0xff]
  %v52 = vld [vmem:[%s4 + $0x38] sm:$0xff]
  %v53 = vld [vmem:[%s4 + $0x40] sm:$0xff]
  %v54 = vld [vmem:[%s4 + $0x48] sm:$0xff]
  %v55 = vld [vmem:[%s4 + $0x50] sm:$0xff]
  %v56 = vld [vmem:[%s4 + $0x58] sm:$0xff]
  %v57 = vld [vmem:[%s4 + $0x60] sm:$0xff]
  %v58 = vld [vmem:[%s4 + $0x68] sm:$0xff]
  %v59 = vld [vmem:[%s4 + $0x70] sm:$0xff]
  %v60 = vld [vmem:[%s4 + $0x78] sm:$0xff]
  %v61 = vld [vmem:[%s4 + $0x80] sm:$0xff]
  %v62 = vld [vmem:[%s4 + $0x88] sm:$0xff]
  %v63 = vld [vmem:[%s4 + $0x90] sm:$0xff]
  %v64 = vld [vmem:[%s4 + $0x98] sm:$0xff]
  %v65 = vld [vmem:[%s4 + $0xa0] sm:$0xff]
  %v66 = vld [vmem:[%s4 + $0xa8] sm:$0xff]
  %v67 = vld [vmem:[%s4 + $0xb0] sm:$0xff]
  %v68 = vld [vmem:[%s4 + $0xb8] sm:$0xff]
  %v69 = vld [vmem:[%s4 + $0xc0] sm:$0xff]
  %v70 = vld [vmem:[%s4 + $0xc8] sm:$0xff]
  %v71 = vld [vmem:[%s4 + $0xd0] sm:$0xff]
  %v72 = vld [vmem:[%s4 + $0xd8] sm:$0xff]
  %v73 = vld [vmem:[%s4 + $0xe0] sm:$0xff]
  %v74 = vld [vmem:[%s4 + $0xe8] sm:$0xff]
  %v75 = vld [vmem:[%s4 + $0xf0] sm:$0xff]
  %v76 = vld [vmem:[%s4 + $0xf8] sm:$0xff]
  %v77 = vld [vmem:[%s7 + $0x80] sm:$0xf]
  %v78 = vld [vmem:[%s7 + $0x84] sm:$0xf]
  %v79 = vld [vmem:[%s7 + $0x88] sm:$0xf]
  %v80 = vld [vmem:[%s7 + $0x8c] sm:$0xf]
  %v81 = vld [vmem:[%s7 + $0x90] sm:$0xf]
  %v82 = vld [vmem:[%s7 + $0x94] sm:$0xf]
  %v83 = vld [vmem:[%s7 + $0x98] sm:$0xf]
  %v84 = vld [vmem:[%s7 + $0x9c] sm:$0xf]
  %v85 = vld [vmem:[%s7 + $0xa0] sm:$0xf]
  %v86 = vld [vmem:[%s7 + $0xa4] sm:$0xf]
  %v87 = vld [vmem:[%s7 + $0xa8] sm:$0xf]
  %v88 = vld [vmem:[%s7 + $0xac] sm:$0xf]
  %v89 = vld [vmem:[%s7 + $0xb0] sm:$0xf]
  %v90 = vld [vmem:[%s7 + $0xb4] sm:$0xf]
  %v91 = vld [vmem:[%s7 + $0xb8] sm:$0xf]
  %v92 = vld [vmem:[%s7 + $0xbc] sm:$0xf]
  %v93 = vld [vmem:[%s7 + $0xc0] sm:$0xf]
  %v94 = vld [vmem:[%s7 + $0xc4] sm:$0xf]
  %v95 = vld [vmem:[%s7 + $0xc8] sm:$0xf]
  %v96 = vld [vmem:[%s7 + $0xcc] sm:$0xf]
  %v97 = vld [vmem:[%s7 + $0xd0] sm:$0xf]
  %v98 = vld [vmem:[%s7 + $0xd4] sm:$0xf]
  %v99 = vld [vmem:[%s7 + $0xd8] sm:$0xf]
  %v100 = vld [vmem:[%s7 + $0xdc] sm:$0xf]
  %v101 = vld [vmem:[%s7 + $0xe0] sm:$0xf]
  %v102 = vld [vmem:[%s7 + $0xe4] sm:$0xf]
  %v103 = vld [vmem:[%s7 + $0xe8] sm:$0xf]
  %v104 = vld [vmem:[%s7 + $0xec] sm:$0xf]
  %v105 = vld [vmem:[%s7 + $0xf0] sm:$0xf]
  %v106 = vld [vmem:[%s7 + $0xf4] sm:$0xf]
  %v107 = vld [vmem:[%s7 + $0xf8] sm:$0xf]
  %v108 = vld [vmem:[%s7 + $0xfc] sm:$0xf]
  %v109 = vld [vmem:[%s0] sm:$0xff]
  %v110 = vld [vmem:[%s0 + $0x8] sm:$0xff]
  %v111 = vld [vmem:[%s0 + $0x10] sm:$0xff]
  %v112 = vld [vmem:[%s0 + $0x18] sm:$0xff]
  %v113 = vld [vmem:[%s0 + $0x20] sm:$0xff]
  %v114 = vld [vmem:[%s0 + $0x28] sm:$0xff]
  %v115 = vld [vmem:[%s0 + $0x30] sm:$0xff]
  %v116 = vld [vmem:[%s0 + $0x38] sm:$0xff]
  %v117 = vld [vmem:[%s0 + $0x40] sm:$0xff]
  %v118 = vld [vmem:[%s0 + $0x48] sm:$0xff]
  %v119 = vld [vmem:[%s0 + $0x50] sm:$0xff]
  %v120 = vld [vmem:[%s0 + $0x58] sm:$0xff]
  %v121 = vld [vmem:[%s0 + $0x60] sm:$0xff]
  %v122 = vld [vmem:[%s0 + $0x68] sm:$0xff]
  %v123 = vld [vmem:[%s0 + $0x70] sm:$0xff]
  %v124 = vld [vmem:[%s0 + $0x78] sm:$0xff]
  %v125 = vld [vmem:[%s0 + $0x80] sm:$0xff]
  %v126 = vld [vmem:[%s0 + $0x88] sm:$0xff]
  %v127 = vld [vmem:[%s0 + $0x90] sm:$0xff]
  %v128 = vld [vmem:[%s0 + $0x98] sm:$0xff]
  %v129 = vld [vmem:[%s0 + $0xa0] sm:$0xff]
  %v130 = vld [vmem:[%s0 + $0xa8] sm:$0xff]
  %v131 = vld [vmem:[%s0 + $0xb0] sm:$0xff]
  %v132 = vld [vmem:[%s0 + $0xb8] sm:$0xff]
  %v133 = vld [vmem:[%s0 + $0xc0] sm:$0xff]
  %v134 = vld [vmem:[%s0 + $0xc8] sm:$0xff]
  %v135 = vld [vmem:[%s0 + $0xd0] sm:$0xff]
  %v136 = vld [vmem:[%s0 + $0xd8] sm:$0xff]
  %v137 = vld [vmem:[%s0 + $0xe0] sm:$0xff]
  %v138 = vld [vmem:[%s0 + $0xe8] sm:$0xff]
  %v139 = vld [vmem:[%s0 + $0xf0] sm:$0xff]
  %v140 = vld [vmem:[%s0 + $0xf8] sm:$0xff]
  %v173 = vunpack.c.l.b16 %v109
  %v174 = vunpack.c.h.b16 %v109
  %v175 = vunpack.c.l.b16 %v110
  %v176 = vunpack.c.h.b16 %v110
  %v177 = vunpack.c.l.b16 %v111
  %v178 = vunpack.c.h.b16 %v111
  %v179 = vunpack.c.l.b16 %v112
  %v180 = vunpack.c.h.b16 %v112
  %v181 = vunpack.c.l.b16 %v113
  %v182 = vunpack.c.h.b16 %v113
  %v183 = vunpack.c.l.b16 %v114
  %v184 = vunpack.c.h.b16 %v114
  %v185 = vunpack.c.l.b16 %v115
  %v186 = vunpack.c.h.b16 %v115
  %v187 = vunpack.c.l.b16 %v116
  %v188 = vunpack.c.h.b16 %v116
  %v189 = vunpack.c.l.b16 %v117
  %v190 = vunpack.c.h.b16 %v117
  %v191 = vunpack.c.l.b16 %v118
  %v192 = vunpack.c.h.b16 %v118
  %v193 = vunpack.c.l.b16 %v119
  %v194 = vunpack.c.h.b16 %v119
  %v195 = vunpack.c.l.b16 %v120
  %v196 = vunpack.c.h.b16 %v120
  %v197 = vunpack.c.l.b16 %v121
  %v198 = vunpack.c.h.b16 %v121
  %v199 = vunpack.c.l.b16 %v122
  %v200 = vunpack.c.h.b16 %v122
  %v201 = vunpack.c.l.b16 %v123
  %v202 = vunpack.c.h.b16 %v123
  %v203 = vunpack.c.l.b16 %v124
  %v204 = vunpack.c.h.b16 %v124
  %v205 = vunpack.c.l.b16 %v125
  %v206 = vunpack.c.h.b16 %v125
  %v207 = vunpack.c.l.b16 %v126
  %v208 = vunpack.c.h.b16 %v126
  %v209 = vunpack.c.l.b16 %v127
  %v210 = vunpack.c.h.b16 %v127
  %v211 = vunpack.c.l.b16 %v128
  %v212 = vunpack.c.h.b16 %v128
  %v213 = vunpack.c.l.b16 %v129
  %v214 = vunpack.c.h.b16 %v129
  %v215 = vunpack.c.l.b16 %v130
  %v216 = vunpack.c.h.b16 %v130
  %v217 = vunpack.c.l.b16 %v131
  %v218 = vunpack.c.h.b16 %v131
  %v219 = vunpack.c.l.b16 %v132
  %v220 = vunpack.c.h.b16 %v132
  %v221 = vunpack.c.l.b16 %v133
  %v222 = vunpack.c.h.b16 %v133
  %v223 = vunpack.c.l.b16 %v134
  %v224 = vunpack.c.h.b16 %v134
  %v225 = vunpack.c.l.b16 %v135
  %v226 = vunpack.c.h.b16 %v135
  %v227 = vunpack.c.l.b16 %v136
  %v228 = vunpack.c.h.b16 %v136
  %v229 = vunpack.c.l.b16 %v137
  %v230 = vunpack.c.h.b16 %v137
  %v231 = vunpack.c.l.b16 %v138
  %v232 = vunpack.c.h.b16 %v138
  %v233 = vunpack.c.l.b16 %v139
  %v234 = vunpack.c.h.b16 %v139
  %v235 = vunpack.c.l.b16 %v140
  %v236 = vunpack.c.h.b16 %v140
  %v237 = vpack.c.b16 %v175, %v173
  %v238 = vpack.c.b16 %v176, %v174
  %v239 = vpack.c.b16 %v179, %v177
  %v240 = vpack.c.b16 %v180, %v178
  %v241 = vpack.c.b16 %v183, %v181
  %v242 = vpack.c.b16 %v184, %v182
  %v243 = vpack.c.b16 %v187, %v185
  %v244 = vpack.c.b16 %v188, %v186
  %v245 = vpack.c.b16 %v191, %v189
  %v246 = vpack.c.b16 %v192, %v190
  %v247 = vpack.c.b16 %v195, %v193
  %v248 = vpack.c.b16 %v196, %v194
  %v249 = vpack.c.b16 %v199, %v197
  %v250 = vpack.c.b16 %v200, %v198
  %v251 = vpack.c.b16 %v203, %v201
  %v252 = vpack.c.b16 %v204, %v202
  %v253 = vpack.c.b16 %v207, %v205
  %v254 = vpack.c.b16 %v208, %v206
  %v255 = vpack.c.b16 %v211, %v209
  %v256 = vpack.c.b16 %v212, %v210
  %v257 = vpack.c.b16 %v215, %v213
  %v258 = vpack.c.b16 %v216, %v214
  %v259 = vpack.c.b16 %v219, %v217
  %v260 = vpack.c.b16 %v220, %v218
  %v261 = vpack.c.b16 %v223, %v221
  %v262 = vpack.c.b16 %v224, %v222
  %v263 = vpack.c.b16 %v227, %v225
  %v264 = vpack.c.b16 %v228, %v226
  %v265 = vpack.c.b16 %v231, %v229
  %v266 = vpack.c.b16 %v232, %v230
  %v267 = vpack.c.b16 %v235, %v233
  %v268 = vpack.c.b16 %v236, %v234
  %v333 = vunpack.c.l.b16 %v77
  %v334 = vunpack.c.l.b16 %v78
  %v335 = vunpack.c.l.b16 %v79
  %v336 = vunpack.c.l.b16 %v80
  %v337 = vunpack.c.l.b16 %v81
  %v338 = vunpack.c.l.b16 %v82
  %v339 = vunpack.c.l.b16 %v83
  %v340 = vunpack.c.l.b16 %v84
  %v341 = vunpack.c.l.b16 %v85
  %v342 = vunpack.c.l.b16 %v86
  %v343 = vunpack.c.l.b16 %v87
  %v344 = vunpack.c.l.b16 %v88
  %v345 = vunpack.c.l.b16 %v89
  %v346 = vunpack.c.l.b16 %v90
  %v347 = vunpack.c.l.b16 %v91
  %v348 = vunpack.c.l.b16 %v92
  %v349 = vunpack.c.l.b16 %v93
  %v350 = vunpack.c.l.b16 %v94
  %v351 = vunpack.c.l.b16 %v95
  %v352 = vunpack.c.l.b16 %v96
  %v353 = vunpack.c.l.b16 %v97
  %v354 = vunpack.c.l.b16 %v98
  %v355 = vunpack.c.l.b16 %v99
  %v356 = vunpack.c.l.b16 %v100
  %v357 = vunpack.c.l.b16 %v101
  %v358 = vunpack.c.l.b16 %v102
  %v359 = vunpack.c.l.b16 %v103
  %v360 = vunpack.c.l.b16 %v104
  %v361 = vunpack.c.l.b16 %v105
  %v362 = vunpack.c.l.b16 %v106
  %v363 = vunpack.c.l.b16 %v107
  %v364 = vunpack.c.l.b16 %v108
  %v365 = vpack.c.b16 %v334, %v333
  %v366 = vpack.c.b16 %v336, %v335
  %v367 = vpack.c.b16 %v338, %v337
  %v368 = vpack.c.b16 %v340, %v339
  %v369 = vpack.c.b16 %v342, %v341
  %v370 = vpack.c.b16 %v344, %v343
  %v371 = vpack.c.b16 %v346, %v345
  %v372 = vpack.c.b16 %v348, %v347
  %v373 = vpack.c.b16 %v350, %v349
  %v374 = vpack.c.b16 %v352, %v351
  %v375 = vpack.c.b16 %v354, %v353
  %v376 = vpack.c.b16 %v356, %v355
  %v377 = vpack.c.b16 %v358, %v357
  %v378 = vpack.c.b16 %v360, %v359
  %v379 = vpack.c.b16 %v362, %v361
  %v380 = vpack.c.b16 %v364, %v363
  %397 = vmatprep.subr.bf16.mxu0 0
  %398 = vmatpush1.bf16.msra.mxu0 %v365
  %399 = vmatprep.subr.bf16.mxu0 0
  %400 = vmatpush1.bf16.msra.mxu0 %v366
  %401 = vmatprep.subr.bf16.mxu0 0
  %402 = vmatpush1.bf16.msra.mxu0 %v367
  %403 = vmatprep.subr.bf16.mxu0 0
  %404 = vmatpush1.bf16.msra.mxu0 %v368
  %405 = vmatprep.subr.bf16.mxu0 0
  %406 = vmatpush1.bf16.msra.mxu0 %v369
  %407 = vmatprep.subr.bf16.mxu0 0
  %408 = vmatpush1.bf16.msra.mxu0 %v370
  %409 = vmatprep.subr.bf16.mxu0 0
  %410 = vmatpush1.bf16.msra.mxu0 %v371
  %411 = vmatprep.subr.bf16.mxu0 0
  %412 = vmatpush1.bf16.msra.mxu0 %v372
  %413 = vmatprep.subr.bf16.mxu0 0
  %414 = vmatpush1.bf16.msra.mxu0 %v373
  %415 = vmatprep.subr.bf16.mxu0 0
  %416 = vmatpush1.bf16.msra.mxu0 %v374
  %417 = vmatprep.subr.bf16.mxu0 0
  %418 = vmatpush1.bf16.msra.mxu0 %v375
  %419 = vmatprep.subr.bf16.mxu0 0
  %420 = vmatpush1.bf16.msra.mxu0 %v376
  %421 = vmatprep.subr.bf16.mxu0 0
  %422 = vmatpush1.bf16.msra.mxu0 %v377
  %423 = vmatprep.subr.bf16.mxu0 0
  %424 = vmatpush1.bf16.msra.mxu0 %v378
  %425 = vmatprep.subr.bf16.mxu0 0
  %426 = vmatpush1.bf16.msra.mxu0 %v379
  %427 = vmatprep.subr.bf16.mxu0 0
  %428 = vmatpush1.bf16.msra.mxu0 %v380
  %429 = vmatprep.mubr.bf16.mxu0 %v238
  %430 = vmatmul.mubr.bf16.gmra.mrb[0].mxu0 %v237
  %v431 = vpop.f32.mrb[0].mxu0
  %v432 = vadd.f32 0.0, %v431
  %v433 = vpop.f32.mrb[0].mxu0
  %v434 = vpop.f32.mrb[0].mxu0
  %v435 = vadd.f32 0.0, %v434
  %v436 = vpop.f32.mrb[0].mxu0
  %437 = vmatprep.mubr.bf16.mxu0 %v240
  %438 = vmatmul.mubr.bf16.gmra.mrb[0].mxu0 %v239
  %v439 = vpop.f32.mrb[0].mxu0
  %v440 = vadd.f32 0.0, %v439
  %v441 = vpop.f32.mrb[0].mxu0
  %v442 = vpop.f32.mrb[0].mxu0
  %v443 = vadd.f32 0.0, %v442
  %v444 = vpop.f32.mrb[0].mxu0
  %445 = vmatprep.mubr.bf16.mxu0 %v242
  %446 = vmatmul.mubr.bf16.gmra.mrb[0].mxu0 %v241
  %v447 = vpop.f32.mrb[0].mxu0
  %v448 = vadd.f32 0.0, %v447
  %v449 = vpop.f32.mrb[0].mxu0
  %v450 = vpop.f32.mrb[0].mxu0
  %v451 = vadd.f32 0.0, %v450
  %v452 = vpop.f32.mrb[0].mxu0
  %453 = vmatprep.mubr.bf16.mxu0 %v244
  %454 = vmatmul.mubr.bf16.gmra.mrb[0].mxu0 %v243
  %v455 = vpop.f32.mrb[0].mxu0
  %v456 = vadd.f32 0.0, %v455
  %v457 = vpop.f32.mrb[0].mxu0
  %v458 = vpop.f32.mrb[0].mxu0
  %v459 = vadd.f32 0.0, %v458
  %v460 = vpop.f32.mrb[0].mxu0
  %461 = vmatprep.mubr.bf16.mxu0 %v246
  %462 = vmatmul.mubr.bf16.gmra.mrb[0].mxu0 %v245
  %v463 = vpop.f32.mrb[0].mxu0
  %v464 = vadd.f32 0.0, %v463
  %v465 = vpop.f32.mrb[0].mxu0
  %v466 = vpop.f32.mrb[0].mxu0
  %v467 = vadd.f32 0.0, %v466
  %v468 = vpop.f32.mrb[0].mxu0
  %469 = vmatprep.mubr.bf16.mxu0 %v248
  %470 = vmatmul.mubr.bf16.gmra.mrb[0].mxu0 %v247
  %v471 = vpop.f32.mrb[0].mxu0
  %v472 = vadd.f32 0.0, %v471
  %v473 = vpop.f32.mrb[0].mxu0
  %v474 = vpop.f32.mrb[0].mxu0
  %v475 = vadd.f32 0.0, %v474
  %v476 = vpop.f32.mrb[0].mxu0
  %477 = vmatprep.mubr.bf16.mxu0 %v250
  %478 = vmatmul.mubr.bf16.gmra.mrb[0].mxu0 %v249
  %v479 = vpop.f32.mrb[0].mxu0
  %v480 = vadd.f32 0.0, %v479
  %v481 = vpop.f32.mrb[0].mxu0
  %v482 = vpop.f32.mrb[0].mxu0
  %v483 = vadd.f32 0.0, %v482
  %v484 = vpop.f32.mrb[0].mxu0
  %485 = vmatprep.mubr.bf16.mxu0 %v252
  %486 = vmatmul.mubr.bf16.gmra.mrb[0].mxu0 %v251
  %v487 = vpop.f32.mrb[0].mxu0
  %v488 = vadd.f32 0.0, %v487
  %v489 = vpop.f32.mrb[0].mxu0
  %v490 = vpop.f32.mrb[0].mxu0
  %v491 = vadd.f32 0.0, %v490
  %v492 = vpop.f32.mrb[0].mxu0
  %493 = vmatprep.mubr.bf16.mxu0 %v254
  %494 = vmatmul.mubr.bf16.gmra.mrb[0].mxu0 %v253
  %v495 = vpop.f32.mrb[0].mxu0
  %v496 = vadd.f32 0.0, %v495
  %v497 = vpop.f32.mrb[0].mxu0
  %v498 = vpop.f32.mrb[0].mxu0
  %v499 = vadd.f32 0.0, %v498
  %v500 = vpop.f32.mrb[0].mxu0
  %501 = vmatprep.mubr.bf16.mxu0 %v256
  %502 = vmatmul.mubr.bf16.gmra.mrb[0].mxu0 %v255
  %v503 = vpop.f32.mrb[0].mxu0
  %v504 = vadd.f32 0.0, %v503
  %v505 = vpop.f32.mrb[0].mxu0
  %v506 = vpop.f32.mrb[0].mxu0
  %v507 = vadd.f32 0.0, %v506
  %v508 = vpop.f32.mrb[0].mxu0
  %509 = vmatprep.mubr.bf16.mxu0 %v258
  %510 = vmatmul.mubr.bf16.gmra.mrb[0].mxu0 %v257
  %v511 = vpop.f32.mrb[0].mxu0
  %v512 = vadd.f32 0.0, %v511
  %v513 = vpop.f32.mrb[0].mxu0
  %v514 = vpop.f32.mrb[0].mxu0
  %v515 = vadd.f32 0.0, %v514
  %v516 = vpop.f32.mrb[0].mxu0
  %517 = vmatprep.mubr.bf16.mxu0 %v260
  %518 = vmatmul.mubr.bf16.gmra.mrb[0].mxu0 %v259
  %v519 = vpop.f32.mrb[0].mxu0
  %v520 = vadd.f32 0.0, %v519
  %v521 = vpop.f32.mrb[0].mxu0
  %v522 = vpop.f32.mrb[0].mxu0
  %v523 = vadd.f32 0.0, %v522
  %v524 = vpop.f32.mrb[0].mxu0
  %525 = vmatprep.mubr.bf16.mxu0 %v262
  %526 = vmatmul.mubr.bf16.gmra.mrb[0].mxu0 %v261
  %v527 = vpop.f32.mrb[0].mxu0
  %v528 = vadd.f32 0.0, %v527
  %v529 = vpop.f32.mrb[0].mxu0
  %v530 = vpop.f32.mrb[0].mxu0
  %v531 = vadd.f32 0.0, %v530
  %v532 = vpop.f32.mrb[0].mxu0
  %533 = vmatprep.mubr.bf16.mxu0 %v264
  %534 = vmatmul.mubr.bf16.gmra.mrb[0].mxu0 %v263
  %v535 = vpop.f32.mrb[0].mxu0
  %v536 = vadd.f32 0.0, %v535
  %v537 = vpop.f32.mrb[0].mxu0
  %v538 = vpop.f32.mrb[0].mxu0
  %v539 = vadd.f32 0.0, %v538
  %v540 = vpop.f32.mrb[0].mxu0
  %541 = vmatprep.mubr.bf16.mxu0 %v266
  %542 = vmatmul.mubr.bf16.gmra.mrb[0].mxu0 %v265
  %v543 = vpop.f32.mrb[0].mxu0
  %v544 = vadd.f32 0.0, %v543
  %v545 = vpop.f32.mrb[0].mxu0
  %v546 = vpop.f32.mrb[0].mxu0
  %v547 = vadd.f32 0.0, %v546
  %v548 = vpop.f32.mrb[0].mxu0
  %549 = vmatprep.mubr.bf16.mxu0 %v268
  %550 = vmatmul.mubr.bf16.gmra.mrb[0].mxu0 %v267
  %v551 = vpop.f32.mrb[0].mxu0
  %v552 = vadd.f32 0.0, %v551
  %v553 = vpop.f32.mrb[0].mxu0
  %v554 = vpop.f32.mrb[0].mxu0
  %v555 = vadd.f32 0.0, %v554
  %v556 = vpop.f32.mrb[0].mxu0
  %557 = vdwg.mxu0
  %v558 = vld [vmem:[%s1] sm:$0xff]
  %v559 = vld [vmem:[%s1 + $0x8] sm:$0xff]
  %v560 = vld [vmem:[%s1 + $0x10] sm:$0xff]
  %v561 = vld [vmem:[%s1 + $0x18] sm:$0xff]
  %v562 = vld [vmem:[%s1 + $0x20] sm:$0xff]
  %v563 = vld [vmem:[%s1 + $0x28] sm:$0xff]
  %v564 = vld [vmem:[%s1 + $0x30] sm:$0xff]
  %v565 = vld [vmem:[%s1 + $0x38] sm:$0xff]
  %v566 = vld [vmem:[%s1 + $0x40] sm:$0xff]
  %v567 = vld [vmem:[%s1 + $0x48] sm:$0xff]
  %v568 = vld [vmem:[%s1 + $0x50] sm:$0xff]
  %v569 = vld [vmem:[%s1 + $0x58] sm:$0xff]
  %v570 = vld [vmem:[%s1 + $0x60] sm:$0xff]
  %v571 = vld [vmem:[%s1 + $0x68] sm:$0xff]
  %v572 = vld [vmem:[%s1 + $0x70] sm:$0xff]
  %v573 = vld [vmem:[%s1 + $0x78] sm:$0xff]
  %v574 = vld [vmem:[%s1 + $0x80] sm:$0xff]
  %v575 = vld [vmem:[%s1 + $0x88] sm:$0xff]
  %v576 = vld [vmem:[%s1 + $0x90] sm:$0xff]
  %v577 = vld [vmem:[%s1 + $0x98] sm:$0xff]
  %v578 = vld [vmem:[%s1 + $0xa0] sm:$0xff]
  %v579 = vld [vmem:[%s1 + $0xa8] sm:$0xff]
  %v580 = vld [vmem:[%s1 + $0xb0] sm:$0xff]
  %v581 = vld [vmem:[%s1 + $0xb8] sm:$0xff]
  %v582 = vld [vmem:[%s1 + $0xc0] sm:$0xff]
  %v583 = vld [vmem:[%s1 + $0xc8] sm:$0xff]
  %v584 = vld [vmem:[%s1 + $0xd0] sm:$0xff]
  %v585 = vld [vmem:[%s1 + $0xd8] sm:$0xff]
  %v586 = vld [vmem:[%s1 + $0xe0] sm:$0xff]
  %v587 = vld [vmem:[%s1 + $0xe8] sm:$0xff]
  %v588 = vld [vmem:[%s1 + $0xf0] sm:$0xff]
  %v589 = vld [vmem:[%s1 + $0xf8] sm:$0xff]
  %v590 = vpack.c.bf16 %v435, %v432
  %v591 = vpack.c.bf16 %v443, %v440
  %v592 = vpack.c.bf16 %v451, %v448
  %v593 = vpack.c.bf16 %v459, %v456
  %v594 = vpack.c.bf16 %v467, %v464
  %v595 = vpack.c.bf16 %v475, %v472
  %v596 = vpack.c.bf16 %v483, %v480
  %v597 = vpack.c.bf16 %v491, %v488
  %v598 = vpack.c.bf16 %v499, %v496
  %v599 = vpack.c.bf16 %v507, %v504
  %v600 = vpack.c.bf16 %v515, %v512
  %v601 = vpack.c.bf16 %v523, %v520
  %v602 = vpack.c.bf16 %v531, %v528
  %v603 = vpack.c.bf16 %v539, %v536
  %v604 = vpack.c.bf16 %v547, %v544
  %v605 = vpack.c.bf16 %v555, %v552
  %v638 = vunpack.c.l.b16 %v558
  %v639 = vunpack.c.h.b16 %v558
  %v640 = vunpack.c.l.b16 %v559
  %v641 = vunpack.c.h.b16 %v559
  %v642 = vunpack.c.l.b16 %v560
  %v643 = vunpack.c.h.b16 %v560
  %v644 = vunpack.c.l.b16 %v561
  %v645 = vunpack.c.h.b16 %v561
  %v646 = vunpack.c.l.b16 %v562
  %v647 = vunpack.c.h.b16 %v562
  %v648 = vunpack.c.l.b16 %v563
  %v649 = vunpack.c.h.b16 %v563
  %v650 = vunpack.c.l.b16 %v564
  %v651 = vunpack.c.h.b16 %v564
  %v652 = vunpack.c.l.b16 %v565
  %v653 = vunpack.c.h.b16 %v565
  %v654 = vunpack.c.l.b16 %v566
  %v655 = vunpack.c.h.b16 %v566
  %v656 = vunpack.c.l.b16 %v567
  %v657 = vunpack.c.h.b16 %v567
  %v658 = vunpack.c.l.b16 %v568
  %v659 = vunpack.c.h.b16 %v568
  %v660 = vunpack.c.l.b16 %v569
  %v661 = vunpack.c.h.b16 %v569
  %v662 = vunpack.c.l.b16 %v570
  %v663 = vunpack.c.h.b16 %v570
  %v664 = vunpack.c.l.b16 %v571
  %v665 = vunpack.c.h.b16 %v571
  %v666 = vunpack.c.l.b16 %v572
  %v667 = vunpack.c.h.b16 %v572
  %v668 = vunpack.c.l.b16 %v573
  %v669 = vunpack.c.h.b16 %v573
  %v670 = vunpack.c.l.b16 %v574
  %v671 = vunpack.c.h.b16 %v574
  %v672 = vunpack.c.l.b16 %v575
  %v673 = vunpack.c.h.b16 %v575
  %v674 = vunpack.c.l.b16 %v576
  %v675 = vunpack.c.h.b16 %v576
  %v676 = vunpack.c.l.b16 %v577
  %v677 = vunpack.c.h.b16 %v577
  %v678 = vunpack.c.l.b16 %v578
  %v679 = vunpack.c.h.b16 %v578
  %v680 = vunpack.c.l.b16 %v579
  %v681 = vunpack.c.h.b16 %v579
  %v682 = vunpack.c.l.b16 %v580
  %v683 = vunpack.c.h.b16 %v580
  %v684 = vunpack.c.l.b16 %v581
  %v685 = vunpack.c.h.b16 %v581
  %v686 = vunpack.c.l.b16 %v582
  %v687 = vunpack.c.h.b16 %v582
  %v688 = vunpack.c.l.b16 %v583
  %v689 = vunpack.c.h.b16 %v583
  %v690 = vunpack.c.l.b16 %v584
  %v691 = vunpack.c.h.b16 %v584
  %v692 = vunpack.c.l.b16 %v585
  %v693 = vunpack.c.h.b16 %v585
  %v694 = vunpack.c.l.b16 %v586
  %v695 = vunpack.c.h.b16 %v586
  %v696 = vunpack.c.l.b16 %v587
  %v697 = vunpack.c.h.b16 %v587
  %v698 = vunpack.c.l.b16 %v588
  %v699 = vunpack.c.h.b16 %v588
  %v700 = vunpack.c.l.b16 %v589
  %v701 = vunpack.c.h.b16 %v589
  %v702 = vpack.c.b16 %v640, %v638
  %v703 = vpack.c.b16 %v641, %v639
  %v704 = vpack.c.b16 %v644, %v642
  %v705 = vpack.c.b16 %v645, %v643
  %v706 = vpack.c.b16 %v648, %v646
  %v707 = vpack.c.b16 %v649, %v647
  %v708 = vpack.c.b16 %v652, %v650
  %v709 = vpack.c.b16 %v653, %v651
  %v710 = vpack.c.b16 %v656, %v654
  %v711 = vpack.c.b16 %v657, %v655
  %v712 = vpack.c.b16 %v660, %v658
  %v713 = vpack.c.b16 %v661, %v659
  %v714 = vpack.c.b16 %v664, %v662
  %v715 = vpack.c.b16 %v665, %v663
  %v716 = vpack.c.b16 %v668, %v666
  %v717 = vpack.c.b16 %v669, %v667
  %v718 = vpack.c.b16 %v672, %v670
  %v719 = vpack.c.b16 %v673, %v671
  %v720 = vpack.c.b16 %v676, %v674
  %v721 = vpack.c.b16 %v677, %v675
  %v722 = vpack.c.b16 %v680, %v678
  %v723 = vpack.c.b16 %v681, %v679
  %v724 = vpack.c.b16 %v684, %v682
  %v725 = vpack.c.b16 %v685, %v683
  %v726 = vpack.c.b16 %v688, %v686
  %v727 = vpack.c.b16 %v689, %v687
  %v728 = vpack.c.b16 %v692, %v690
  %v729 = vpack.c.b16 %v693, %v691
  %v730 = vpack.c.b16 %v696, %v694
  %v731 = vpack.c.b16 %v697, %v695
  %v732 = vpack.c.b16 %v700, %v698
  %v733 = vpack.c.b16 %v701, %v699
  %766 = vmatprep.subr.bf16.mxu0 0
  %767 = vmatpush1.bf16.msra.mxu0 %v590
  %768 = vmatprep.subr.bf16.mxu0 0
  %769 = vmatpush1.bf16.msra.mxu0 %v591
  %770 = vmatprep.subr.bf16.mxu0 0
  %771 = vmatpush1.bf16.msra.mxu0 %v592
  %772 = vmatprep.subr.bf16.mxu0 0
  %773 = vmatpush1.bf16.msra.mxu0 %v593
  %774 = vmatprep.subr.bf16.mxu0 0
  %775 = vmatpush1.bf16.msra.mxu0 %v594
  %776 = vmatprep.subr.bf16.mxu0 0
  %777 = vmatpush1.bf16.msra.mxu0 %v595
  %778 = vmatprep.subr.bf16.mxu0 0
  %779 = vmatpush1.bf16.msra.mxu0 %v596
  %780 = vmatprep.subr.bf16.mxu0 0
  %781 = vmatpush1.bf16.msra.mxu0 %v597
  %782 = vmatprep.subr.bf16.mxu0 0
  %783 = vmatpush1.bf16.msra.mxu0 %v598
  %784 = vmatprep.subr.bf16.mxu0 0
  %785 = vmatpush1.bf16.msra.mxu0 %v599
  %786 = vmatprep.subr.bf16.mxu0 0
  %787 = vmatpush1.bf16.msra.mxu0 %v600
  %788 = vmatprep.subr.bf16.mxu0 0
  %789 = vmatpush1.bf16.msra.mxu0 %v601
  %790 = vmatprep.subr.bf16.mxu0 0
  %791 = vmatpush1.bf16.msra.mxu0 %v602
  %792 = vmatprep.subr.bf16.mxu0 0
  %793 = vmatpush1.bf16.msra.mxu0 %v603
  %794 = vmatprep.subr.bf16.mxu0 0
  %795 = vmatpush1.bf16.msra.mxu0 %v604
  %796 = vmatprep.subr.bf16.mxu0 0
  %797 = vmatpush1.bf16.msra.mxu0 %v605
  %798 = vmatprep.mubr.bf16.mxu0 %v703
  %799 = vmatmul.mubr.bf16.gmra.mrb[0].mxu0 %v702
  %v800 = vpop.f32.mrb[0].mxu0
  %v801 = vadd.f32 0.0, %v800
  %v802 = vpop.f32.mrb[0].mxu0
  %v803 = vpop.f32.mrb[0].mxu0
  %v804 = vadd.f32 0.0, %v803
  %v805 = vpop.f32.mrb[0].mxu0
  %806 = vmatprep.mubr.bf16.mxu0 %v705
  %807 = vmatmul.mubr.bf16.gmra.mrb[0].mxu0 %v704
  %v808 = vpop.f32.mrb[0].mxu0
  %v809 = vadd.f32 0.0, %v808
  %v810 = vpop.f32.mrb[0].mxu0
  %v811 = vpop.f32.mrb[0].mxu0
  %v812 = vadd.f32 0.0, %v811
  %v813 = vpop.f32.mrb[0].mxu0
  %814 = vmatprep.mubr.bf16.mxu0 %v707
  %815 = vmatmul.mubr.bf16.gmra.mrb[0].mxu0 %v706
  %v816 = vpop.f32.mrb[0].mxu0
  %v817 = vadd.f32 0.0, %v816
  %v818 = vpop.f32.mrb[0].mxu0
  %v819 = vpop.f32.mrb[0].mxu0
  %v820 = vadd.f32 0.0, %v819
  %v821 = vpop.f32.mrb[0].mxu0
  %822 = vmatprep.mubr.bf16.mxu0 %v709
  %823 = vmatmul.mubr.bf16.gmra.mrb[0].mxu0 %v708
  %v824 = vpop.f32.mrb[0].mxu0
  %v825 = vadd.f32 0.0, %v824
  %v826 = vpop.f32.mrb[0].mxu0
  %v827 = vpop.f32.mrb[0].mxu0
  %v828 = vadd.f32 0.0, %v827
  %v829 = vpop.f32.mrb[0].mxu0
  %830 = vmatprep.mubr.bf16.mxu0 %v711
  %831 = vmatmul.mubr.bf16.gmra.mrb[0].mxu0 %v710
  %v832 = vpop.f32.mrb[0].mxu0
  %v833 = vadd.f32 0.0, %v832
  %v834 = vpop.f32.mrb[0].mxu0
  %v835 = vpop.f32.mrb[0].mxu0
  %v836 = vadd.f32 0.0, %v835
  %v837 = vpop.f32.mrb[0].mxu0
  %838 = vmatprep.mubr.bf16.mxu0 %v713
  %839 = vmatmul.mubr.bf16.gmra.mrb[0].mxu0 %v712
  %v840 = vpop.f32.mrb[0].mxu0
  %v841 = vadd.f32 0.0, %v840
  %v842 = vpop.f32.mrb[0].mxu0
  %v843 = vpop.f32.mrb[0].mxu0
  %v844 = vadd.f32 0.0, %v843
  %v845 = vpop.f32.mrb[0].mxu0
  %846 = vmatprep.mubr.bf16.mxu0 %v715
  %847 = vmatmul.mubr.bf16.gmra.mrb[0].mxu0 %v714
  %v848 = vpop.f32.mrb[0].mxu0
  %v849 = vadd.f32 0.0, %v848
  %v850 = vpop.f32.mrb[0].mxu0
  %v851 = vpop.f32.mrb[0].mxu0
  %v852 = vadd.f32 0.0, %v851
  %v853 = vpop.f32.mrb[0].mxu0
  %854 = vmatprep.mubr.bf16.mxu0 %v717
  %855 = vmatmul.mubr.bf16.gmra.mrb[0].mxu0 %v716
  %v856 = vpop.f32.mrb[0].mxu0
  %v857 = vadd.f32 0.0, %v856
  %v858 = vpop.f32.mrb[0].mxu0
  %v859 = vpop.f32.mrb[0].mxu0
  %v860 = vadd.f32 0.0, %v859
  %v861 = vpop.f32.mrb[0].mxu0
  %862 = vmatprep.mubr.bf16.mxu0 %v719
  %863 = vmatmul.mubr.bf16.gmra.mrb[0].mxu0 %v718
  %v864 = vpop.f32.mrb[0].mxu0
  %v865 = vadd.f32 0.0, %v864
  %v866 = vpop.f32.mrb[0].mxu0
  %v867 = vpop.f32.mrb[0].mxu0
  %v868 = vadd.f32 0.0, %v867
  %v869 = vpop.f32.mrb[0].mxu0
  %870 = vmatprep.mubr.bf16.mxu0 %v721
  %871 = vmatmul.mubr.bf16.gmra.mrb[0].mxu0 %v720
  %v872 = vpop.f32.mrb[0].mxu0
  %v873 = vadd.f32 0.0, %v872
  %v874 = vpop.f32.mrb[0].mxu0
  %v875 = vpop.f32.mrb[0].mxu0
  %v876 = vadd.f32 0.0, %v875
  %v877 = vpop.f32.mrb[0].mxu0
  %878 = vmatprep.mubr.bf16.mxu0 %v723
  %879 = vmatmul.mubr.bf16.gmra.mrb[0].mxu0 %v722
  %v880 = vpop.f32.mrb[0].mxu0
  %v881 = vadd.f32 0.0, %v880
  %v882 = vpop.f32.mrb[0].mxu0
  %v883 = vpop.f32.mrb[0].mxu0
  %v884 = vadd.f32 0.0, %v883
  %v885 = vpop.f32.mrb[0].mxu0
  %886 = vmatprep.mubr.bf16.mxu0 %v725
  %887 = vmatmul.mubr.bf16.gmra.mrb[0].mxu0 %v724
  %v888 = vpop.f32.mrb[0].mxu0
  %v889 = vadd.f32 0.0, %v888
  %v890 = vpop.f32.mrb[0].mxu0
  %v891 = vpop.f32.mrb[0].mxu0
  %v892 = vadd.f32 0.0, %v891
  %v893 = vpop.f32.mrb[0].mxu0
  %894 = vmatprep.mubr.bf16.mxu0 %v727
  %895 = vmatmul.mubr.bf16.gmra.mrb[0].mxu0 %v726
  %v896 = vpop.f32.mrb[0].mxu0
  %v897 = vadd.f32 0.0, %v896
  %v898 = vpop.f32.mrb[0].mxu0
  %v899 = vpop.f32.mrb[0].mxu0
  %v900 = vadd.f32 0.0, %v899
  %v901 = vpop.f32.mrb[0].mxu0
  %902 = vmatprep.mubr.bf16.mxu0 %v729
  %903 = vmatmul.mubr.bf16.gmra.mrb[0].mxu0 %v728
  %v904 = vpop.f32.mrb[0].mxu0
  %v905 = vadd.f32 0.0, %v904
  %v906 = vpop.f32.mrb[0].mxu0
  %v907 = vpop.f32.mrb[0].mxu0
  %v908 = vadd.f32 0.0, %v907
  %v909 = vpop.f32.mrb[0].mxu0
  %910 = vmatprep.mubr.bf16.mxu0 %v731
  %911 = vmatmul.mubr.bf16.gmra.mrb[0].mxu0 %v730
  %v912 = vpop.f32.mrb[0].mxu0
  %v913 = vadd.f32 0.0, %v912
  %v914 = vpop.f32.mrb[0].mxu0
  %v915 = vpop.f32.mrb[0].mxu0
  %v916 = vadd.f32 0.0, %v915
  %v917 = vpop.f32.mrb[0].mxu0
  %918 = vmatprep.mubr.bf16.mxu0 %v733
  %919 = vmatmul.mubr.bf16.gmra.mrb[0].mxu0 %v732
  %v920 = vpop.f32.mrb[0].mxu0
  %v921 = vadd.f32 0.0, %v920
  %v922 = vpop.f32.mrb[0].mxu0
  %v923 = vpop.f32.mrb[0].mxu0
  %v924 = vadd.f32 0.0, %v923
  %v925 = vpop.f32.mrb[0].mxu0
  %926 = vdwg.mxu0
  %928 = vset.pattern.permute.xlu0 0
  %929 = vperm.xlu0 %928, %v45
  %v930 = vpop.permute.xlu0 %929
  %933 = vset.pattern.permute.xlu0 0
  %934 = vperm.xlu0 %933, %v46
  %v935 = vpop.permute.xlu0 %934
  %938 = vset.pattern.permute.xlu0 0
  %939 = vperm.xlu0 %938, %v47
  %v940 = vpop.permute.xlu0 %939
  %943 = vset.pattern.permute.xlu0 0
  %944 = vperm.xlu0 %943, %v48
  %v945 = vpop.permute.xlu0 %944
  %948 = vset.pattern.permute.xlu0 0
  %949 = vperm.xlu0 %948, %v49
  %v950 = vpop.permute.xlu0 %949
  %953 = vset.pattern.permute.xlu0 0
  %954 = vperm.xlu0 %953, %v50
  %v955 = vpop.permute.xlu0 %954
  %958 = vset.pattern.permute.xlu0 0
  %959 = vperm.xlu0 %958, %v51
  %v960 = vpop.permute.xlu0 %959
  %963 = vset.pattern.permute.xlu0 0
  %964 = vperm.xlu0 %963, %v52
  %v965 = vpop.permute.xlu0 %964
  %968 = vset.pattern.permute.xlu0 0
  %969 = vperm.xlu0 %968, %v53
  %v970 = vpop.permute.xlu0 %969
  %973 = vset.pattern.permute.xlu0 0
  %974 = vperm.xlu0 %973, %v54
  %v975 = vpop.permute.xlu0 %974
  %978 = vset.pattern.permute.xlu0 0
  %979 = vperm.xlu0 %978, %v55
  %v980 = vpop.permute.xlu0 %979
  %983 = vset.pattern.permute.xlu0 0
  %984 = vperm.xlu0 %983, %v56
  %v985 = vpop.permute.xlu0 %984
  %988 = vset.pattern.permute.xlu0 0
  %989 = vperm.xlu0 %988, %v57
  %v990 = vpop.permute.xlu0 %989
  %993 = vset.pattern.permute.xlu0 0
  %994 = vperm.xlu0 %993, %v58
  %v995 = vpop.permute.xlu0 %994
  %998 = vset.pattern.permute.xlu0 0
  %999 = vperm.xlu0 %998, %v59
  %v1000 = vpop.permute.xlu0 %999
  %1003 = vset.pattern.permute.xlu0 0
  %1004 = vperm.xlu0 %1003, %v60
  %v1005 = vpop.permute.xlu0 %1004
  %1008 = vset.pattern.permute.xlu0 0
  %1009 = vperm.xlu0 %1008, %v61
  %v1010 = vpop.permute.xlu0 %1009
  %1013 = vset.pattern.permute.xlu0 0
  %1014 = vperm.xlu0 %1013, %v62
  %v1015 = vpop.permute.xlu0 %1014
  %1018 = vset.pattern.permute.xlu0 0
  %1019 = vperm.xlu0 %1018, %v63
  %v1020 = vpop.permute.xlu0 %1019
  %1023 = vset.pattern.permute.xlu0 0
  %1024 = vperm.xlu0 %1023, %v64
  %v1025 = vpop.permute.xlu0 %1024
  %1028 = vset.pattern.permute.xlu0 0
  %1029 = vperm.xlu0 %1028, %v65
  %v1030 = vpop.permute.xlu0 %1029
  %1033 = vset.pattern.permute.xlu0 0
  %1034 = vperm.xlu0 %1033, %v66
  %v1035 = vpop.permute.xlu0 %1034
  %1038 = vset.pattern.permute.xlu0 0
  %1039 = vperm.xlu0 %1038, %v67
  %v1040 = vpop.permute.xlu0 %1039
  %1043 = vset.pattern.permute.xlu0 0
  %1044 = vperm.xlu0 %1043, %v68
  %v1045 = vpop.permute.xlu0 %1044
  %1048 = vset.pattern.permute.xlu0 0
  %1049 = vperm.xlu0 %1048, %v69
  %v1050 = vpop.permute.xlu0 %1049
  %1053 = vset.pattern.permute.xlu0 0
  %1054 = vperm.xlu0 %1053, %v70
  %v1055 = vpop.permute.xlu0 %1054
  %1058 = vset.pattern.permute.xlu0 0
  %1059 = vperm.xlu0 %1058, %v71
  %v1060 = vpop.permute.xlu0 %1059
  %1063 = vset.pattern.permute.xlu0 0
  %1064 = vperm.xlu0 %1063, %v72
  %v1065 = vpop.permute.xlu0 %1064
  %1068 = vset.pattern.permute.xlu0 0
  %1069 = vperm.xlu0 %1068, %v73
  %v1070 = vpop.permute.xlu0 %1069
  %1073 = vset.pattern.permute.xlu0 0
  %1074 = vperm.xlu0 %1073, %v74
  %v1075 = vpop.permute.xlu0 %1074
  %1078 = vset.pattern.permute.xlu0 0
  %1079 = vperm.xlu0 %1078, %v75
  %v1080 = vpop.permute.xlu0 %1079
  %1083 = vset.pattern.permute.xlu0 0
  %1084 = vperm.xlu0 %1083, %v76
  %v1085 = vpop.permute.xlu0 %1084
  %v1087 = vmul.f32 %v801, %v930
  %v1088 = vmul.f32 %v804, %v935
  %v1089 = vmul.f32 %v809, %v940
  %v1090 = vmul.f32 %v812, %v945
  %v1091 = vmul.f32 %v817, %v950
  %v1092 = vmul.f32 %v820, %v955
  %v1093 = vmul.f32 %v825, %v960
  %v1094 = vmul.f32 %v828, %v965
  %v1095 = vmul.f32 %v833, %v970
  %v1096 = vmul.f32 %v836, %v975
  %v1097 = vmul.f32 %v841, %v980
  %v1098 = vmul.f32 %v844, %v985
  %v1099 = vmul.f32 %v849, %v990
  %v1100 = vmul.f32 %v852, %v995
  %v1101 = vmul.f32 %v857, %v1000
  %v1102 = vmul.f32 %v860, %v1005
  %v1103 = vmul.f32 %v865, %v1010
  %v1104 = vmul.f32 %v868, %v1015
  %v1105 = vmul.f32 %v873, %v1020
  %v1106 = vmul.f32 %v876, %v1025
  %v1107 = vmul.f32 %v881, %v1030
  %v1108 = vmul.f32 %v884, %v1035
  %v1109 = vmul.f32 %v889, %v1040
  %v1110 = vmul.f32 %v892, %v1045
  %v1111 = vmul.f32 %v897, %v1050
  %v1112 = vmul.f32 %v900, %v1055
  %v1113 = vmul.f32 %v905, %v1060
  %v1114 = vmul.f32 %v908, %v1065
  %v1115 = vmul.f32 %v913, %v1070
  %v1116 = vmul.f32 %v916, %v1075
  %v1117 = vmul.f32 %v921, %v1080
  %v1118 = vmul.f32 %v924, %v1085
  %v1119 = vld [vmem:[%s7] sm:$0xf]
  %v1120 = vld [vmem:[%s7 + $0x4] sm:$0xf]
  %v1121 = vld [vmem:[%s7 + $0x8] sm:$0xf]
  %v1122 = vld [vmem:[%s7 + $0xc] sm:$0xf]
  %v1123 = vld [vmem:[%s7 + $0x10] sm:$0xf]
  %v1124 = vld [vmem:[%s7 + $0x14] sm:$0xf]
  %v1125 = vld [vmem:[%s7 + $0x18] sm:$0xf]
  %v1126 = vld [vmem:[%s7 + $0x1c] sm:$0xf]
  %v1127 = vld [vmem:[%s7 + $0x20] sm:$0xf]
  %v1128 = vld [vmem:[%s7 + $0x24] sm:$0xf]
  %v1129 = vld [vmem:[%s7 + $0x28] sm:$0xf]
  %v1130 = vld [vmem:[%s7 + $0x2c] sm:$0xf]
  %v1131 = vld [vmem:[%s7 + $0x30] sm:$0xf]
  %v1132 = vld [vmem:[%s7 + $0x34] sm:$0xf]
  %v1133 = vld [vmem:[%s7 + $0x38] sm:$0xf]
  %v1134 = vld [vmem:[%s7 + $0x3c] sm:$0xf]
  %v1135 = vld [vmem:[%s7 + $0x40] sm:$0xf]
  %v1136 = vld [vmem:[%s7 + $0x44] sm:$0xf]
  %v1137 = vld [vmem:[%s7 + $0x48] sm:$0xf]
  %v1138 = vld [vmem:[%s7 + $0x4c] sm:$0xf]
  %v1139 = vld [vmem:[%s7 + $0x50] sm:$0xf]
  %v1140 = vld [vmem:[%s7 + $0x54] sm:$0xf]
  %v1141 = vld [vmem:[%s7 + $0x58] sm:$0xf]
  %v1142 = vld [vmem:[%s7 + $0x5c] sm:$0xf]
  %v1143 = vld [vmem:[%s7 + $0x60] sm:$0xf]
  %v1144 = vld [vmem:[%s7 + $0x64] sm:$0xf]
  %v1145 = vld [vmem:[%s7 + $0x68] sm:$0xf]
  %v1146 = vld [vmem:[%s7 + $0x6c] sm:$0xf]
  %v1147 = vld [vmem:[%s7 + $0x70] sm:$0xf]
  %v1148 = vld [vmem:[%s7 + $0x74] sm:$0xf]
  %v1149 = vld [vmem:[%s7 + $0x78] sm:$0xf]
  %v1150 = vld [vmem:[%s7 + $0x7c] sm:$0xf]
  %v1183 = vunpack.c.l.b16 %v1119
  %v1184 = vunpack.c.l.b16 %v1120
  %v1185 = vunpack.c.l.b16 %v1121
  %v1186 = vunpack.c.l.b16 %v1122
  %v1187 = vunpack.c.l.b16 %v1123
  %v1188 = vunpack.c.l.b16 %v1124
  %v1189 = vunpack.c.l.b16 %v1125
  %v1190 = vunpack.c.l.b16 %v1126
  %v1191 = vunpack.c.l.b16 %v1127
  %v1192 = vunpack.c.l.b16 %v1128
  %v1193 = vunpack.c.l.b16 %v1129
  %v1194 = vunpack.c.l.b16 %v1130
  %v1195 = vunpack.c.l.b16 %v1131
  %v1196 = vunpack.c.l.b16 %v1132
  %v1197 = vunpack.c.l.b16 %v1133
  %v1198 = vunpack.c.l.b16 %v1134
  %v1199 = vunpack.c.l.b16 %v1135
  %v1200 = vunpack.c.l.b16 %v1136
  %v1201 = vunpack.c.l.b16 %v1137
  %v1202 = vunpack.c.l.b16 %v1138
  %v1203 = vunpack.c.l.b16 %v1139
  %v1204 = vunpack.c.l.b16 %v1140
  %v1205 = vunpack.c.l.b16 %v1141
  %v1206 = vunpack.c.l.b16 %v1142
  %v1207 = vunpack.c.l.b16 %v1143
  %v1208 = vunpack.c.l.b16 %v1144
  %v1209 = vunpack.c.l.b16 %v1145
  %v1210 = vunpack.c.l.b16 %v1146
  %v1211 = vunpack.c.l.b16 %v1147
  %v1212 = vunpack.c.l.b16 %v1148
  %v1213 = vunpack.c.l.b16 %v1149
  %v1214 = vunpack.c.l.b16 %v1150
  %v1215 = vpack.c.b16 %v1184, %v1183
  %v1216 = vpack.c.b16 %v1186, %v1185
  %v1217 = vpack.c.b16 %v1188, %v1187
  %v1218 = vpack.c.b16 %v1190, %v1189
  %v1219 = vpack.c.b16 %v1192, %v1191
  %v1220 = vpack.c.b16 %v1194, %v1193
  %v1221 = vpack.c.b16 %v1196, %v1195
  %v1222 = vpack.c.b16 %v1198, %v1197
  %v1223 = vpack.c.b16 %v1200, %v1199
  %v1224 = vpack.c.b16 %v1202, %v1201
  %v1225 = vpack.c.b16 %v1204, %v1203
  %v1226 = vpack.c.b16 %v1206, %v1205
  %v1227 = vpack.c.b16 %v1208, %v1207
  %v1228 = vpack.c.b16 %v1210, %v1209
  %v1229 = vpack.c.b16 %v1212, %v1211
  %v1230 = vpack.c.b16 %v1214, %v1213
  %1247 = vmatprep.subr.bf16.mxu0 0
  %1248 = vmatpush1.bf16.msra.mxu0 %v1215
  %1249 = vmatprep.subr.bf16.mxu0 0
  %1250 = vmatpush1.bf16.msra.mxu0 %v1216
  %1251 = vmatprep.subr.bf16.mxu0 0
  %1252 = vmatpush1.bf16.msra.mxu0 %v1217
  %1253 = vmatprep.subr.bf16.mxu0 0
  %1254 = vmatpush1.bf16.msra.mxu0 %v1218
  %1255 = vmatprep.subr.bf16.mxu0 0
  %1256 = vmatpush1.bf16.msra.mxu0 %v1219
  %1257 = vmatprep.subr.bf16.mxu0 0
  %1258 = vmatpush1.bf16.msra.mxu0 %v1220
  %1259 = vmatprep.subr.bf16.mxu0 0
  %1260 = vmatpush1.bf16.msra.mxu0 %v1221
  %1261 = vmatprep.subr.bf16.mxu0 0
  %1262 = vmatpush1.bf16.msra.mxu0 %v1222
  %1263 = vmatprep.subr.bf16.mxu0 0
  %1264 = vmatpush1.bf16.msra.mxu0 %v1223
  %1265 = vmatprep.subr.bf16.mxu0 0
  %1266 = vmatpush1.bf16.msra.mxu0 %v1224
  %1267 = vmatprep.subr.bf16.mxu0 0
  %1268 = vmatpush1.bf16.msra.mxu0 %v1225
  %1269 = vmatprep.subr.bf16.mxu0 0
  %1270 = vmatpush1.bf16.msra.mxu0 %v1226
  %1271 = vmatprep.subr.bf16.mxu0 0
  %1272 = vmatpush1.bf16.msra.mxu0 %v1227
  %1273 = vmatprep.subr.bf16.mxu0 0
  %1274 = vmatpush1.bf16.msra.mxu0 %v1228
  %1275 = vmatprep.subr.bf16.mxu0 0
  %1276 = vmatpush1.bf16.msra.mxu0 %v1229
  %1277 = vmatprep.subr.bf16.mxu0 0
  %1278 = vmatpush1.bf16.msra.mxu0 %v1230
  %1279 = vmatprep.mubr.bf16.mxu0 %v238
  %1280 = vmatmul.mubr.bf16.gmra.mrb[0].mxu0 %v237
  %v1281 = vpop.f32.mrb[0].mxu0
  %v1282 = vadd.f32 %v1087, %v1281
  %v1283 = vpop.f32.mrb[0].mxu0
  %v1284 = vpop.f32.mrb[0].mxu0
  %v1285 = vadd.f32 %v1088, %v1284
  %v1286 = vpop.f32.mrb[0].mxu0
  %1287 = vmatprep.mubr.bf16.mxu0 %v240
  %1288 = vmatmul.mubr.bf16.gmra.mrb[0].mxu0 %v239
  %v1289 = vpop.f32.mrb[0].mxu0
  %v1290 = vadd.f32 %v1089, %v1289
  %v1291 = vpop.f32.mrb[0].mxu0
  %v1292 = vpop.f32.mrb[0].mxu0
  %v1293 = vadd.f32 %v1090, %v1292
  %v1294 = vpop.f32.mrb[0].mxu0
  %1295 = vmatprep.mubr.bf16.mxu0 %v242
  %1296 = vmatmul.mubr.bf16.gmra.mrb[0].mxu0 %v241
  %v1297 = vpop.f32.mrb[0].mxu0
  %v1298 = vadd.f32 %v1091, %v1297
  %v1299 = vpop.f32.mrb[0].mxu0
  %v1300 = vpop.f32.mrb[0].mxu0
  %v1301 = vadd.f32 %v1092, %v1300
  %v1302 = vpop.f32.mrb[0].mxu0
  %1303 = vmatprep.mubr.bf16.mxu0 %v244
  %1304 = vmatmul.mubr.bf16.gmra.mrb[0].mxu0 %v243
  %v1305 = vpop.f32.mrb[0].mxu0
  %v1306 = vadd.f32 %v1093, %v1305
  %v1307 = vpop.f32.mrb[0].mxu0
  %v1308 = vpop.f32.mrb[0].mxu0
  %v1309 = vadd.f32 %v1094, %v1308
  %v1310 = vpop.f32.mrb[0].mxu0
  %1311 = vmatprep.mubr.bf16.mxu0 %v246
  %1312 = vmatmul.mubr.bf16.gmra.mrb[0].mxu0 %v245
  %v1313 = vpop.f32.mrb[0].mxu0
  %v1314 = vadd.f32 %v1095, %v1313
  %v1315 = vpop.f32.mrb[0].mxu0
  %v1316 = vpop.f32.mrb[0].mxu0
  %v1317 = vadd.f32 %v1096, %v1316
  %v1318 = vpop.f32.mrb[0].mxu0
  %1319 = vmatprep.mubr.bf16.mxu0 %v248
  %1320 = vmatmul.mubr.bf16.gmra.mrb[0].mxu0 %v247
  %v1321 = vpop.f32.mrb[0].mxu0
  %v1322 = vadd.f32 %v1097, %v1321
  %v1323 = vpop.f32.mrb[0].mxu0
  %v1324 = vpop.f32.mrb[0].mxu0
  %v1325 = vadd.f32 %v1098, %v1324
  %v1326 = vpop.f32.mrb[0].mxu0
  %1327 = vmatprep.mubr.bf16.mxu0 %v250
  %1328 = vmatmul.mubr.bf16.gmra.mrb[0].mxu0 %v249
  %v1329 = vpop.f32.mrb[0].mxu0
  %v1330 = vadd.f32 %v1099, %v1329
  %v1331 = vpop.f32.mrb[0].mxu0
  %v1332 = vpop.f32.mrb[0].mxu0
  %v1333 = vadd.f32 %v1100, %v1332
  %v1334 = vpop.f32.mrb[0].mxu0
  %1335 = vmatprep.mubr.bf16.mxu0 %v252
  %1336 = vmatmul.mubr.bf16.gmra.mrb[0].mxu0 %v251
  %v1337 = vpop.f32.mrb[0].mxu0
  %v1338 = vadd.f32 %v1101, %v1337
  %v1339 = vpop.f32.mrb[0].mxu0
  %v1340 = vpop.f32.mrb[0].mxu0
  %v1341 = vadd.f32 %v1102, %v1340
  %v1342 = vpop.f32.mrb[0].mxu0
  %1343 = vmatprep.mubr.bf16.mxu0 %v254
  %1344 = vmatmul.mubr.bf16.gmra.mrb[0].mxu0 %v253
  %v1345 = vpop.f32.mrb[0].mxu0
  %v1346 = vadd.f32 %v1103, %v1345
  %v1347 = vpop.f32.mrb[0].mxu0
  %v1348 = vpop.f32.mrb[0].mxu0
  %v1349 = vadd.f32 %v1104, %v1348
  %v1350 = vpop.f32.mrb[0].mxu0
  %1351 = vmatprep.mubr.bf16.mxu0 %v256
  %1352 = vmatmul.mubr.bf16.gmra.mrb[0].mxu0 %v255
  %v1353 = vpop.f32.mrb[0].mxu0
  %v1354 = vadd.f32 %v1105, %v1353
  %v1355 = vpop.f32.mrb[0].mxu0
  %v1356 = vpop.f32.mrb[0].mxu0
  %v1357 = vadd.f32 %v1106, %v1356
  %v1358 = vpop.f32.mrb[0].mxu0
  %1359 = vmatprep.mubr.bf16.mxu0 %v258
  %1360 = vmatmul.mubr.bf16.gmra.mrb[0].mxu0 %v257
  %v1361 = vpop.f32.mrb[0].mxu0
  %v1362 = vadd.f32 %v1107, %v1361
  %v1363 = vpop.f32.mrb[0].mxu0
  %v1364 = vpop.f32.mrb[0].mxu0
  %v1365 = vadd.f32 %v1108, %v1364
  %v1366 = vpop.f32.mrb[0].mxu0
  %1367 = vmatprep.mubr.bf16.mxu0 %v260
  %1368 = vmatmul.mubr.bf16.gmra.mrb[0].mxu0 %v259
  %v1369 = vpop.f32.mrb[0].mxu0
  %v1370 = vadd.f32 %v1109, %v1369
  %v1371 = vpop.f32.mrb[0].mxu0
  %v1372 = vpop.f32.mrb[0].mxu0
  %v1373 = vadd.f32 %v1110, %v1372
  %v1374 = vpop.f32.mrb[0].mxu0
  %1375 = vmatprep.mubr.bf16.mxu0 %v262
  %1376 = vmatmul.mubr.bf16.gmra.mrb[0].mxu0 %v261
  %v1377 = vpop.f32.mrb[0].mxu0
  %v1378 = vadd.f32 %v1111, %v1377
  %v1379 = vpop.f32.mrb[0].mxu0
  %v1380 = vpop.f32.mrb[0].mxu0
  %v1381 = vadd.f32 %v1112, %v1380
  %v1382 = vpop.f32.mrb[0].mxu0
  %1383 = vmatprep.mubr.bf16.mxu0 %v264
  %1384 = vmatmul.mubr.bf16.gmra.mrb[0].mxu0 %v263
  %v1385 = vpop.f32.mrb[0].mxu0
  %v1386 = vadd.f32 %v1113, %v1385
  %v1387 = vpop.f32.mrb[0].mxu0
  %v1388 = vpop.f32.mrb[0].mxu0
  %v1389 = vadd.f32 %v1114, %v1388
  %v1390 = vpop.f32.mrb[0].mxu0
  %1391 = vmatprep.mubr.bf16.mxu0 %v266
  %1392 = vmatmul.mubr.bf16.gmra.mrb[0].mxu0 %v265
  %v1393 = vpop.f32.mrb[0].mxu0
  %v1394 = vadd.f32 %v1115, %v1393
  %v1395 = vpop.f32.mrb[0].mxu0
  %v1396 = vpop.f32.mrb[0].mxu0
  %v1397 = vadd.f32 %v1116, %v1396
  %v1398 = vpop.f32.mrb[0].mxu0
  %1399 = vmatprep.mubr.bf16.mxu0 %v268
  %1400 = vmatmul.mubr.bf16.gmra.mrb[0].mxu0 %v267
  %v1401 = vpop.f32.mrb[0].mxu0
  %v1402 = vadd.f32 %v1117, %v1401
  %v1403 = vpop.f32.mrb[0].mxu0
  %v1404 = vpop.f32.mrb[0].mxu0
  %v1405 = vadd.f32 %v1118, %v1404
  %v1406 = vpop.f32.mrb[0].mxu0
  %1407 = vdwg.mxu0
  %v1408 = vld [vmem:[%s10] sm:$0x1]
  %v1410 = vlaneseq
  %v1411 = vshrl.u32 %v1410, 7
  %v1412 = vsub.s32 0, %v1411
  %v1413 = vrot.slane %v1408, %v1412
  %v1415 = vadd.f32 %v1282, %v1413
  %v1416 = vadd.f32 %v1285, %v1413
  %v1417 = vadd.f32 %v1290, %v1413
  %v1418 = vadd.f32 %v1293, %v1413
  %v1419 = vadd.f32 %v1298, %v1413
  %v1420 = vadd.f32 %v1301, %v1413
  %v1421 = vadd.f32 %v1306, %v1413
  %v1422 = vadd.f32 %v1309, %v1413
  %v1423 = vadd.f32 %v1314, %v1413
  %v1424 = vadd.f32 %v1317, %v1413
  %v1425 = vadd.f32 %v1322, %v1413
  %v1426 = vadd.f32 %v1325, %v1413
  %v1427 = vadd.f32 %v1330, %v1413
  %v1428 = vadd.f32 %v1333, %v1413
  %v1429 = vadd.f32 %v1338, %v1413
  %v1430 = vadd.f32 %v1341, %v1413
  %v1431 = vadd.f32 %v1346, %v1413
  %v1432 = vadd.f32 %v1349, %v1413
  %v1433 = vadd.f32 %v1354, %v1413
  %v1434 = vadd.f32 %v1357, %v1413
  %v1435 = vadd.f32 %v1362, %v1413
  %v1436 = vadd.f32 %v1365, %v1413
  %v1437 = vadd.f32 %v1370, %v1413
  %v1438 = vadd.f32 %v1373, %v1413
  %v1439 = vadd.f32 %v1378, %v1413
  %v1440 = vadd.f32 %v1381, %v1413
  %v1441 = vadd.f32 %v1386, %v1413
  %v1442 = vadd.f32 %v1389, %v1413
  %v1443 = vadd.f32 %v1394, %v1413
  %v1444 = vadd.f32 %v1397, %v1413
  %v1445 = vadd.f32 %v1402, %v1413
  %v1446 = vadd.f32 %v1405, %v1413
  %v1447 = vmax.f32 %v1415, 0.0
  %v1448 = vmax.f32 %v1416, 0.0
  %v1449 = vmax.f32 %v1417, 0.0
  %v1450 = vmax.f32 %v1418, 0.0
  %v1451 = vmax.f32 %v1419, 0.0
  %v1452 = vmax.f32 %v1420, 0.0
  %v1453 = vmax.f32 %v1421, 0.0
  %v1454 = vmax.f32 %v1422, 0.0
  %v1455 = vmax.f32 %v1423, 0.0
  %v1456 = vmax.f32 %v1424, 0.0
  %v1457 = vmax.f32 %v1425, 0.0
  %v1458 = vmax.f32 %v1426, 0.0
  %v1459 = vmax.f32 %v1427, 0.0
  %v1460 = vmax.f32 %v1428, 0.0
  %v1461 = vmax.f32 %v1429, 0.0
  %v1462 = vmax.f32 %v1430, 0.0
  %v1463 = vmax.f32 %v1431, 0.0
  %v1464 = vmax.f32 %v1432, 0.0
  %v1465 = vmax.f32 %v1433, 0.0
  %v1466 = vmax.f32 %v1434, 0.0
  %v1467 = vmax.f32 %v1435, 0.0
  %v1468 = vmax.f32 %v1436, 0.0
  %v1469 = vmax.f32 %v1437, 0.0
  %v1470 = vmax.f32 %v1438, 0.0
  %v1471 = vmax.f32 %v1439, 0.0
  %v1472 = vmax.f32 %v1440, 0.0
  %v1473 = vmax.f32 %v1441, 0.0
  %v1474 = vmax.f32 %v1442, 0.0
  %v1475 = vmax.f32 %v1443, 0.0
  %v1476 = vmax.f32 %v1444, 0.0
  %v1477 = vmax.f32 %v1445, 0.0
  %v1478 = vmax.f32 %v1446, 0.0
  %v1479 = vpack.c.bf16 %v1448, %v1447
  %v1480 = vpack.c.bf16 %v1450, %v1449
  %v1481 = vpack.c.bf16 %v1452, %v1451
  %v1482 = vpack.c.bf16 %v1454, %v1453
  %v1483 = vpack.c.bf16 %v1456, %v1455
  %v1484 = vpack.c.bf16 %v1458, %v1457
  %v1485 = vpack.c.bf16 %v1460, %v1459
  %v1486 = vpack.c.bf16 %v1462, %v1461
  %v1487 = vpack.c.bf16 %v1464, %v1463
  %v1488 = vpack.c.bf16 %v1466, %v1465
  %v1489 = vpack.c.bf16 %v1468, %v1467
  %v1490 = vpack.c.bf16 %v1470, %v1469
  %v1491 = vpack.c.bf16 %v1472, %v1471
  %v1492 = vpack.c.bf16 %v1474, %v1473
  %v1493 = vpack.c.bf16 %v1476, %v1475
  %v1494 = vpack.c.bf16 %v1478, %v1477
  %1495 = vst [vmem:[#allocation2] sm:$0xff] %v1479
  %1496 = vst [vmem:[#allocation2 + $0x8] sm:$0xff] %v1480
  %1497 = vst [vmem:[#allocation2 + $0x10] sm:$0xff] %v1481
  %1498 = vst [vmem:[#allocation2 + $0x18] sm:$0xff] %v1482
  %1499 = vst [vmem:[#allocation2 + $0x20] sm:$0xff] %v1483
  %1500 = vst [vmem:[#allocation2 + $0x28] sm:$0xff] %v1484
  %1501 = vst [vmem:[#allocation2 + $0x30] sm:$0xff] %v1485
  %1502 = vst [vmem:[#allocation2 + $0x38] sm:$0xff] %v1486
  %1503 = vst [vmem:[#allocation2 + $0x40] sm:$0xff] %v1487
  %1504 = vst [vmem:[#allocation2 + $0x48] sm:$0xff] %v1488
  %1505 = vst [vmem:[#allocation2 + $0x50] sm:$0xff] %v1489
  %1506 = vst [vmem:[#allocation2 + $0x58] sm:$0xff] %v1490
  %1507 = vst [vmem:[#allocation2 + $0x60] sm:$0xff] %v1491
  %1508 = vst [vmem:[#allocation2 + $0x68] sm:$0xff] %v1492
  %1509 = vst [vmem:[#allocation2 + $0x70] sm:$0xff] %v1493
  %1510 = vst [vmem:[#allocation2 + $0x78] sm:$0xff] %v1494
  %v1511 = vld [vmem:[%s5] sm:$0xff]
  %v1512 = vld [vmem:[%s5 + $0x8] sm:$0xff]
  %v1513 = vld [vmem:[%s5 + $0x10] sm:$0xff]
  %v1514 = vld [vmem:[%s5 + $0x18] sm:$0xff]
  %v1515 = vld [vmem:[%s5 + $0x20] sm:$0xff]
  %v1516 = vld [vmem:[%s5 + $0x28] sm:$0xff]
  %v1517 = vld [vmem:[%s5 + $0x30] sm:$0xff]
  %v1518 = vld [vmem:[%s5 + $0x38] sm:$0xff]
  %v1519 = vld [vmem:[%s5 + $0x40] sm:$0xff]
  %v1520 = vld [vmem:[%s5 + $0x48] sm:$0xff]
  %v1521 = vld [vmem:[%s5 + $0x50] sm:$0xff]
  %v1522 = vld [vmem:[%s5 + $0x58] sm:$0xff]
  %v1523 = vld [vmem:[%s5 + $0x60] sm:$0xff]
  %v1524 = vld [vmem:[%s5 + $0x68] sm:$0xff]
  %v1525 = vld [vmem:[%s5 + $0x70] sm:$0xff]
  %v1526 = vld [vmem:[%s5 + $0x78] sm:$0xff]
  %v1527 = vld [vmem:[%s2] sm:$0xff]
  %v1528 = vld [vmem:[%s2 + $0x8] sm:$0xff]
  %v1529 = vld [vmem:[%s2 + $0x10] sm:$0xff]
  %v1530 = vld [vmem:[%s2 + $0x18] sm:$0xff]
  %v1531 = vld [vmem:[%s2 + $0x20] sm:$0xff]
  %v1532 = vld [vmem:[%s2 + $0x28] sm:$0xff]
  %v1533 = vld [vmem:[%s2 + $0x30] sm:$0xff]
  %v1534 = vld [vmem:[%s2 + $0x38] sm:$0xff]
  %v1535 = vld [vmem:[%s2 + $0x40] sm:$0xff]
  %v1536 = vld [vmem:[%s2 + $0x48] sm:$0xff]
  %v1537 = vld [vmem:[%s2 + $0x50] sm:$0xff]
  %v1538 = vld [vmem:[%s2 + $0x58] sm:$0xff]
  %v1539 = vld [vmem:[%s2 + $0x60] sm:$0xff]
  %v1540 = vld [vmem:[%s2 + $0x68] sm:$0xff]
  %v1541 = vld [vmem:[%s2 + $0x70] sm:$0xff]
  %v1542 = vld [vmem:[%s2 + $0x78] sm:$0xff]
  %v1543 = vld [vmem:[#allocation2] sm:$0xff]
  %v1544 = vld [vmem:[#allocation2 + $0x8] sm:$0xff]
  %v1545 = vld [vmem:[#allocation2 + $0x10] sm:$0xff]
  %v1546 = vld [vmem:[#allocation2 + $0x18] sm:$0xff]
  %v1547 = vld [vmem:[#allocation2 + $0x20] sm:$0xff]
  %v1548 = vld [vmem:[#allocation2 + $0x28] sm:$0xff]
  %v1549 = vld [vmem:[#allocation2 + $0x30] sm:$0xff]
  %v1550 = vld [vmem:[#allocation2 + $0x38] sm:$0xff]
  %v1551 = vld [vmem:[#allocation2 + $0x40] sm:$0xff]
  %v1552 = vld [vmem:[#allocation2 + $0x48] sm:$0xff]
  %v1553 = vld [vmem:[#allocation2 + $0x50] sm:$0xff]
  %v1554 = vld [vmem:[#allocation2 + $0x58] sm:$0xff]
  %v1555 = vld [vmem:[#allocation2 + $0x60] sm:$0xff]
  %v1556 = vld [vmem:[#allocation2 + $0x68] sm:$0xff]
  %v1557 = vld [vmem:[#allocation2 + $0x70] sm:$0xff]
  %v1558 = vld [vmem:[#allocation2 + $0x78] sm:$0xff]
  %v1575 = vunpack.c.l.b16 %v1527
  %v1576 = vunpack.c.h.b16 %v1527
  %v1577 = vunpack.c.l.b16 %v1528
  %v1578 = vunpack.c.h.b16 %v1528
  %v1579 = vunpack.c.l.b16 %v1529
  %v1580 = vunpack.c.h.b16 %v1529
  %v1581 = vunpack.c.l.b16 %v1530
  %v1582 = vunpack.c.h.b16 %v1530
  %v1583 = vunpack.c.l.b16 %v1531
  %v1584 = vunpack.c.h.b16 %v1531
  %v1585 = vunpack.c.l.b16 %v1532
  %v1586 = vunpack.c.h.b16 %v1532
  %v1587 = vunpack.c.l.b16 %v1533
  %v1588 = vunpack.c.h.b16 %v1533
  %v1589 = vunpack.c.l.b16 %v1534
  %v1590 = vunpack.c.h.b16 %v1534
  %v1591 = vunpack.c.l.b16 %v1535
  %v1592 = vunpack.c.h.b16 %v1535
  %v1593 = vunpack.c.l.b16 %v1536
  %v1594 = vunpack.c.h.b16 %v1536
  %v1595 = vunpack.c.l.b16 %v1537
  %v1596 = vunpack.c.h.b16 %v1537
  %v1597 = vunpack.c.l.b16 %v1538
  %v1598 = vunpack.c.h.b16 %v1538
  %v1599 = vunpack.c.l.b16 %v1539
  %v1600 = vunpack.c.h.b16 %v1539
  %v1601 = vunpack.c.l.b16 %v1540
  %v1602 = vunpack.c.h.b16 %v1540
  %v1603 = vunpack.c.l.b16 %v1541
  %v1604 = vunpack.c.h.b16 %v1541
  %v1605 = vunpack.c.l.b16 %v1542
  %v1606 = vunpack.c.h.b16 %v1542
  %v1607 = vpack.c.b16 %v1577, %v1575
  %v1608 = vpack.c.b16 %v1578, %v1576
  %v1609 = vpack.c.b16 %v1581, %v1579
  %v1610 = vpack.c.b16 %v1582, %v1580
  %v1611 = vpack.c.b16 %v1585, %v1583
  %v1612 = vpack.c.b16 %v1586, %v1584
  %v1613 = vpack.c.b16 %v1589, %v1587
  %v1614 = vpack.c.b16 %v1590, %v1588
  %v1615 = vpack.c.b16 %v1593, %v1591
  %v1616 = vpack.c.b16 %v1594, %v1592
  %v1617 = vpack.c.b16 %v1597, %v1595
  %v1618 = vpack.c.b16 %v1598, %v1596
  %v1619 = vpack.c.b16 %v1601, %v1599
  %v1620 = vpack.c.b16 %v1602, %v1600
  %v1621 = vpack.c.b16 %v1605, %v1603
  %v1622 = vpack.c.b16 %v1606, %v1604
  %1639 = vmatprep.subr.bf16.mxu0 0
  %1640 = vmatpush1.bf16.msra.mxu0 %v1543
  %1641 = vmatprep.subr.bf16.mxu0 0
  %1642 = vmatpush1.bf16.msra.mxu0 %v1544
  %1643 = vmatprep.subr.bf16.mxu0 0
  %1644 = vmatpush1.bf16.msra.mxu0 %v1545
  %1645 = vmatprep.subr.bf16.mxu0 0
  %1646 = vmatpush1.bf16.msra.mxu0 %v1546
  %1647 = vmatprep.subr.bf16.mxu0 0
  %1648 = vmatpush1.bf16.msra.mxu0 %v1547
  %1649 = vmatprep.subr.bf16.mxu0 0
  %1650 = vmatpush1.bf16.msra.mxu0 %v1548
  %1651 = vmatprep.subr.bf16.mxu0 0
  %1652 = vmatpush1.bf16.msra.mxu0 %v1549
  %1653 = vmatprep.subr.bf16.mxu0 0
  %1654 = vmatpush1.bf16.msra.mxu0 %v1550
  %1655 = vmatprep.subr.bf16.mxu0 0
  %1656 = vmatpush1.bf16.msra.mxu0 %v1551
  %1657 = vmatprep.subr.bf16.mxu0 0
  %1658 = vmatpush1.bf16.msra.mxu0 %v1552
  %1659 = vmatprep.subr.bf16.mxu0 0
  %1660 = vmatpush1.bf16.msra.mxu0 %v1553
  %1661 = vmatprep.subr.bf16.mxu0 0
  %1662 = vmatpush1.bf16.msra.mxu0 %v1554
  %1663 = vmatprep.subr.bf16.mxu0 0
  %1664 = vmatpush1.bf16.msra.mxu0 %v1555
  %1665 = vmatprep.subr.bf16.mxu0 0
  %1666 = vmatpush1.bf16.msra.mxu0 %v1556
  %1667 = vmatprep.subr.bf16.mxu0 0
  %1668 = vmatpush1.bf16.msra.mxu0 %v1557
  %1669 = vmatprep.subr.bf16.mxu0 0
  %1670 = vmatpush1.bf16.msra.mxu0 %v1558
  %1671 = vmatprep.mubr.bf16.mxu0 %v1608
  %1672 = vmatmul.mubr.bf16.gmra.mrb[0].mxu0 %v1607
  %v1673 = vpop.f32.mrb[0].mxu0
  %v1674 = vadd.f32 0.0, %v1673
  %v1675 = vpop.f32.mrb[0].mxu0
  %v1676 = vpop.f32.mrb[0].mxu0
  %v1677 = vadd.f32 0.0, %v1676
  %v1678 = vpop.f32.mrb[0].mxu0
  %1679 = vmatprep.mubr.bf16.mxu0 %v1610
  %1680 = vmatmul.mubr.bf16.gmra.mrb[0].mxu0 %v1609
  %v1681 = vpop.f32.mrb[0].mxu0
  %v1682 = vadd.f32 0.0, %v1681
  %v1683 = vpop.f32.mrb[0].mxu0
  %v1684 = vpop.f32.mrb[0].mxu0
  %v1685 = vadd.f32 0.0, %v1684
  %v1686 = vpop.f32.mrb[0].mxu0
  %1687 = vmatprep.mubr.bf16.mxu0 %v1612
  %1688 = vmatmul.mubr.bf16.gmra.mrb[0].mxu0 %v1611
  %v1689 = vpop.f32.mrb[0].mxu0
  %v1690 = vadd.f32 0.0, %v1689
  %v1691 = vpop.f32.mrb[0].mxu0
  %v1692 = vpop.f32.mrb[0].mxu0
  %v1693 = vadd.f32 0.0, %v1692
  %v1694 = vpop.f32.mrb[0].mxu0
  %1695 = vmatprep.mubr.bf16.mxu0 %v1614
  %1696 = vmatmul.mubr.bf16.gmra.mrb[0].mxu0 %v1613
  %v1697 = vpop.f32.mrb[0].mxu0
  %v1698 = vadd.f32 0.0, %v1697
  %v1699 = vpop.f32.mrb[0].mxu0
  %v1700 = vpop.f32.mrb[0].mxu0
  %v1701 = vadd.f32 0.0, %v1700
  %v1702 = vpop.f32.mrb[0].mxu0
  %1703 = vmatprep.mubr.bf16.mxu0 %v1616
  %1704 = vmatmul.mubr.bf16.gmra.mrb[0].mxu0 %v1615
  %v1705 = vpop.f32.mrb[0].mxu0
  %v1706 = vadd.f32 0.0, %v1705
  %v1707 = vpop.f32.mrb[0].mxu0
  %v1708 = vpop.f32.mrb[0].mxu0
  %v1709 = vadd.f32 0.0, %v1708
  %v1710 = vpop.f32.mrb[0].mxu0
  %1711 = vmatprep.mubr.bf16.mxu0 %v1618
  %1712 = vmatmul.mubr.bf16.gmra.mrb[0].mxu0 %v1617
  %v1713 = vpop.f32.mrb[0].mxu0
  %v1714 = vadd.f32 0.0, %v1713
  %v1715 = vpop.f32.mrb[0].mxu0
  %v1716 = vpop.f32.mrb[0].mxu0
  %v1717 = vadd.f32 0.0, %v1716
  %v1718 = vpop.f32.mrb[0].mxu0
  %1719 = vmatprep.mubr.bf16.mxu0 %v1620
  %1720 = vmatmul.mubr.bf16.gmra.mrb[0].mxu0 %v1619
  %v1721 = vpop.f32.mrb[0].mxu0
  %v1722 = vadd.f32 0.0, %v1721
  %v1723 = vpop.f32.mrb[0].mxu0
  %v1724 = vpop.f32.mrb[0].mxu0
  %v1725 = vadd.f32 0.0, %v1724
  %v1726 = vpop.f32.mrb[0].mxu0
  %1727 = vmatprep.mubr.bf16.mxu0 %v1622
  %1728 = vmatmul.mubr.bf16.gmra.mrb[0].mxu0 %v1621
  %v1729 = vpop.f32.mrb[0].mxu0
  %v1730 = vadd.f32 0.0, %v1729
  %v1731 = vpop.f32.mrb[0].mxu0
  %v1732 = vpop.f32.mrb[0].mxu0
  %v1733 = vadd.f32 0.0, %v1732
  %v1734 = vpop.f32.mrb[0].mxu0
  %1735 = vdwg.mxu0
  %1737 = vset.pattern.permute.xlu0 0
  %1738 = vperm.xlu0 %1737, %v1511
  %v1739 = vpop.permute.xlu0 %1738
  %1742 = vset.pattern.permute.xlu0 0
  %1743 = vperm.xlu0 %1742, %v1512
  %v1744 = vpop.permute.xlu0 %1743
  %1747 = vset.pattern.permute.xlu0 0
  %1748 = vperm.xlu0 %1747, %v1513
  %v1749 = vpop.permute.xlu0 %1748
  %1752 = vset.pattern.permute.xlu0 0
  %1753 = vperm.xlu0 %1752, %v1514
  %v1754 = vpop.permute.xlu0 %1753
  %1757 = vset.pattern.permute.xlu0 0
  %1758 = vperm.xlu0 %1757, %v1515
  %v1759 = vpop.permute.xlu0 %1758
  %1762 = vset.pattern.permute.xlu0 0
  %1763 = vperm.xlu0 %1762, %v1516
  %v1764 = vpop.permute.xlu0 %1763
  %1767 = vset.pattern.permute.xlu0 0
  %1768 = vperm.xlu0 %1767, %v1517
  %v1769 = vpop.permute.xlu0 %1768
  %1772 = vset.pattern.permute.xlu0 0
  %1773 = vperm.xlu0 %1772, %v1518
  %v1774 = vpop.permute.xlu0 %1773
  %1777 = vset.pattern.permute.xlu0 0
  %1778 = vperm.xlu0 %1777, %v1519
  %v1779 = vpop.permute.xlu0 %1778
  %1782 = vset.pattern.permute.xlu0 0
  %1783 = vperm.xlu0 %1782, %v1520
  %v1784 = vpop.permute.xlu0 %1783
  %1787 = vset.pattern.permute.xlu0 0
  %1788 = vperm.xlu0 %1787, %v1521
  %v1789 = vpop.permute.xlu0 %1788
  %1792 = vset.pattern.permute.xlu0 0
  %1793 = vperm.xlu0 %1792, %v1522
  %v1794 = vpop.permute.xlu0 %1793
  %1797 = vset.pattern.permute.xlu0 0
  %1798 = vperm.xlu0 %1797, %v1523
  %v1799 = vpop.permute.xlu0 %1798
  %1802 = vset.pattern.permute.xlu0 0
  %1803 = vperm.xlu0 %1802, %v1524
  %v1804 = vpop.permute.xlu0 %1803
  %1807 = vset.pattern.permute.xlu0 0
  %1808 = vperm.xlu0 %1807, %v1525
  %v1809 = vpop.permute.xlu0 %1808
  %1812 = vset.pattern.permute.xlu0 0
  %1813 = vperm.xlu0 %1812, %v1526
  %v1814 = vpop.permute.xlu0 %1813
  %v1816 = vmul.f32 %v1674, %v1739
  %v1817 = vmul.f32 %v1677, %v1744
  %v1818 = vmul.f32 %v1682, %v1749
  %v1819 = vmul.f32 %v1685, %v1754
  %v1820 = vmul.f32 %v1690, %v1759
  %v1821 = vmul.f32 %v1693, %v1764
  %v1822 = vmul.f32 %v1698, %v1769
  %v1823 = vmul.f32 %v1701, %v1774
  %v1824 = vmul.f32 %v1706, %v1779
  %v1825 = vmul.f32 %v1709, %v1784
  %v1826 = vmul.f32 %v1714, %v1789
  %v1827 = vmul.f32 %v1717, %v1794
  %v1828 = vmul.f32 %v1722, %v1799
  %v1829 = vmul.f32 %v1725, %v1804
  %v1830 = vmul.f32 %v1730, %v1809
  %v1831 = vmul.f32 %v1733, %v1814
  %v1832 = vld [vmem:[#allocation2] sm:$0xff]
  %v1833 = vld [vmem:[#allocation2 + $0x8] sm:$0xff]
  %v1834 = vld [vmem:[#allocation2 + $0x10] sm:$0xff]
  %v1835 = vld [vmem:[#allocation2 + $0x18] sm:$0xff]
  %v1836 = vld [vmem:[#allocation2 + $0x20] sm:$0xff]
  %v1837 = vld [vmem:[#allocation2 + $0x28] sm:$0xff]
  %v1838 = vld [vmem:[#allocation2 + $0x30] sm:$0xff]
  %v1839 = vld [vmem:[#allocation2 + $0x38] sm:$0xff]
  %1840 = vst [vmem:[#allocation4] sm:$0xff] %v1832
  %1841 = vst [vmem:[#allocation4 + $0x10] sm:$0xff] %v1833
  %1842 = vst [vmem:[#allocation4 + $0x20] sm:$0xff] %v1834
  %1843 = vst [vmem:[#allocation4 + $0x30] sm:$0xff] %v1835
  %1844 = vst [vmem:[#allocation4 + $0x40] sm:$0xff] %v1836
  %1845 = vst [vmem:[#allocation4 + $0x50] sm:$0xff] %v1837
  %1846 = vst [vmem:[#allocation4 + $0x60] sm:$0xff] %v1838
  %1847 = vst [vmem:[#allocation4 + $0x70] sm:$0xff] %v1839
  %v1848 = vpack.c.bf16 %v1817, %v1816
  %v1849 = vpack.c.bf16 %v1819, %v1818
  %v1850 = vpack.c.bf16 %v1821, %v1820
  %v1851 = vpack.c.bf16 %v1823, %v1822
  %v1852 = vpack.c.bf16 %v1825, %v1824
  %v1853 = vpack.c.bf16 %v1827, %v1826
  %v1854 = vpack.c.bf16 %v1829, %v1828
  %v1855 = vpack.c.bf16 %v1831, %v1830
  %1856 = vst [vmem:[#allocation4 + $0x8] sm:$0xff] %v1848
  %1857 = vst [vmem:[#allocation4 + $0x18] sm:$0xff] %v1849
  %1858 = vst [vmem:[#allocation4 + $0x28] sm:$0xff] %v1850
  %1859 = vst [vmem:[#allocation4 + $0x38] sm:$0xff] %v1851
  %1860 = vst [vmem:[#allocation4 + $0x48] sm:$0xff] %v1852
  %1861 = vst [vmem:[#allocation4 + $0x58] sm:$0xff] %v1853
  %1862 = vst [vmem:[#allocation4 + $0x68] sm:$0xff] %v1854
  %1863 = vst [vmem:[#allocation4 + $0x78] sm:$0xff] %v1855
  %v1864 = vld [vmem:[#allocation4] sm:$0xff]
  %v1865 = vld [vmem:[#allocation4 + $0x8] sm:$0xff]
  %v1866 = vld [vmem:[#allocation4 + $0x10] sm:$0xff]
  %v1867 = vld [vmem:[#allocation4 + $0x18] sm:$0xff]
  %v1868 = vld [vmem:[#allocation4 + $0x20] sm:$0xff]
  %v1869 = vld [vmem:[#allocation4 + $0x28] sm:$0xff]
  %v1870 = vld [vmem:[#allocation4 + $0x30] sm:$0xff]
  %v1871 = vld [vmem:[#allocation4 + $0x38] sm:$0xff]
  %v1872 = vld [vmem:[#allocation4 + $0x40] sm:$0xff]
  %v1873 = vld [vmem:[#allocation4 + $0x48] sm:$0xff]
  %v1874 = vld [vmem:[#allocation4 + $0x50] sm:$0xff]
  %v1875 = vld [vmem:[#allocation4 + $0x58] sm:$0xff]
  %v1876 = vld [vmem:[#allocation4 + $0x60] sm:$0xff]
  %v1877 = vld [vmem:[#allocation4 + $0x68] sm:$0xff]
  %v1878 = vld [vmem:[#allocation4 + $0x70] sm:$0xff]
  %v1879 = vld [vmem:[#allocation4 + $0x78] sm:$0xff]
  %v1880 = vld [vmem:[%s8] sm:$0xf]
  %v1881 = vld [vmem:[%s8 + $0x4] sm:$0xf]
  %v1882 = vld [vmem:[%s8 + $0x8] sm:$0xf]
  %v1883 = vld [vmem:[%s8 + $0xc] sm:$0xf]
  %v1884 = vld [vmem:[%s8 + $0x10] sm:$0xf]
  %v1885 = vld [vmem:[%s8 + $0x14] sm:$0xf]
  %v1886 = vld [vmem:[%s8 + $0x18] sm:$0xf]
  %v1887 = vld [vmem:[%s8 + $0x1c] sm:$0xf]
  %v1888 = vld [vmem:[%s8 + $0x20] sm:$0xf]
  %v1889 = vld [vmem:[%s8 + $0x24] sm:$0xf]
  %v1890 = vld [vmem:[%s8 + $0x28] sm:$0xf]
  %v1891 = vld [vmem:[%s8 + $0x2c] sm:$0xf]
  %v1892 = vld [vmem:[%s8 + $0x30] sm:$0xf]
  %v1893 = vld [vmem:[%s8 + $0x34] sm:$0xf]
  %v1894 = vld [vmem:[%s8 + $0x38] sm:$0xf]
  %v1895 = vld [vmem:[%s8 + $0x3c] sm:$0xf]
  %v1896 = vld [vmem:[%s8 + $0x40] sm:$0xf]
  %v1897 = vld [vmem:[%s8 + $0x44] sm:$0xf]
  %v1898 = vld [vmem:[%s8 + $0x48] sm:$0xf]
  %v1899 = vld [vmem:[%s8 + $0x4c] sm:$0xf]
  %v1900 = vld [vmem:[%s8 + $0x50] sm:$0xf]
  %v1901 = vld [vmem:[%s8 + $0x54] sm:$0xf]
  %v1902 = vld [vmem:[%s8 + $0x58] sm:$0xf]
  %v1903 = vld [vmem:[%s8 + $0x5c] sm:$0xf]
  %v1904 = vld [vmem:[%s8 + $0x60] sm:$0xf]
  %v1905 = vld [vmem:[%s8 + $0x64] sm:$0xf]
  %v1906 = vld [vmem:[%s8 + $0x68] sm:$0xf]
  %v1907 = vld [vmem:[%s8 + $0x6c] sm:$0xf]
  %v1908 = vld [vmem:[%s8 + $0x70] sm:$0xf]
  %v1909 = vld [vmem:[%s8 + $0x74] sm:$0xf]
  %v1910 = vld [vmem:[%s8 + $0x78] sm:$0xf]
  %v1911 = vld [vmem:[%s8 + $0x7c] sm:$0xf]
  %v1912 = vld [vmem:[%s11] sm:$0x1]
  %v1914 = vlaneseq
  %v1915 = vshrl.u32 %v1914, 7
  %v1916 = vsub.s32 0, %v1915
  %v1917 = vrot.slane %v1912, %v1916
  %v1951 = vunpack.c.l.b16 %v1880
  %v1952 = vunpack.c.l.b16 %v1881
  %v1953 = vunpack.c.l.b16 %v1882
  %v1954 = vunpack.c.l.b16 %v1883
  %v1955 = vunpack.c.l.b16 %v1884
  %v1956 = vunpack.c.l.b16 %v1885
  %v1957 = vunpack.c.l.b16 %v1886
  %v1958 = vunpack.c.l.b16 %v1887
  %v1959 = vunpack.c.l.b16 %v1888
  %v1960 = vunpack.c.l.b16 %v1889
  %v1961 = vunpack.c.l.b16 %v1890
  %v1962 = vunpack.c.l.b16 %v1891
  %v1963 = vunpack.c.l.b16 %v1892
  %v1964 = vunpack.c.l.b16 %v1893
  %v1965 = vunpack.c.l.b16 %v1894
  %v1966 = vunpack.c.l.b16 %v1895
  %v1967 = vunpack.c.l.b16 %v1896
  %v1968 = vunpack.c.l.b16 %v1897
  %v1969 = vunpack.c.l.b16 %v1898
  %v1970 = vunpack.c.l.b16 %v1899
  %v1971 = vunpack.c.l.b16 %v1900
  %v1972 = vunpack.c.l.b16 %v1901
  %v1973 = vunpack.c.l.b16 %v1902
  %v1974 = vunpack.c.l.b16 %v1903
  %v1975 = vunpack.c.l.b16 %v1904
  %v1976 = vunpack.c.l.b16 %v1905
  %v1977 = vunpack.c.l.b16 %v1906
  %v1978 = vunpack.c.l.b16 %v1907
  %v1979 = vunpack.c.l.b16 %v1908
  %v1980 = vunpack.c.l.b16 %v1909
  %v1981 = vunpack.c.l.b16 %v1910
  %v1982 = vunpack.c.l.b16 %v1911
  %v1983 = vpack.c.b16 %v1952, %v1951
  %v1984 = vpack.c.b16 %v1954, %v1953
  %v1985 = vpack.c.b16 %v1956, %v1955
  %v1986 = vpack.c.b16 %v1958, %v1957
  %v1987 = vpack.c.b16 %v1960, %v1959
  %v1988 = vpack.c.b16 %v1962, %v1961
  %v1989 = vpack.c.b16 %v1964, %v1963
  %v1990 = vpack.c.b16 %v1966, %v1965
  %v1991 = vpack.c.b16 %v1968, %v1967
  %v1992 = vpack.c.b16 %v1970, %v1969
  %v1993 = vpack.c.b16 %v1972, %v1971
  %v1994 = vpack.c.b16 %v1974, %v1973
  %v1995 = vpack.c.b16 %v1976, %v1975
  %v1996 = vpack.c.b16 %v1978, %v1977
  %v1997 = vpack.c.b16 %v1980, %v1979
  %v1998 = vpack.c.b16 %v1982, %v1981
  %2015 = vmatprep.subr.bf16.mxu0 0
  %2016 = vmatpush1.bf16.msra.mxu0 %v1983
  %2017 = vmatprep.subr.bf16.mxu0 0
  %2018 = vmatpush1.bf16.msra.mxu0 %v1984
  %2019 = vmatprep.subr.bf16.mxu0 0
  %2020 = vmatpush1.bf16.msra.mxu0 %v1985
  %2021 = vmatprep.subr.bf16.mxu0 0
  %2022 = vmatpush1.bf16.msra.mxu0 %v1986
  %2023 = vmatprep.subr.bf16.mxu0 0
  %2024 = vmatpush1.bf16.msra.mxu0 %v1987
  %2025 = vmatprep.subr.bf16.mxu0 0
  %2026 = vmatpush1.bf16.msra.mxu0 %v1988
  %2027 = vmatprep.subr.bf16.mxu0 0
  %2028 = vmatpush1.bf16.msra.mxu0 %v1989
  %2029 = vmatprep.subr.bf16.mxu0 0
  %2030 = vmatpush1.bf16.msra.mxu0 %v1990
  %2031 = vmatprep.subr.bf16.mxu0 0
  %2032 = vmatpush1.bf16.msra.mxu0 %v1991
  %2033 = vmatprep.subr.bf16.mxu0 0
  %2034 = vmatpush1.bf16.msra.mxu0 %v1992
  %2035 = vmatprep.subr.bf16.mxu0 0
  %2036 = vmatpush1.bf16.msra.mxu0 %v1993
  %2037 = vmatprep.subr.bf16.mxu0 0
  %2038 = vmatpush1.bf16.msra.mxu0 %v1994
  %2039 = vmatprep.subr.bf16.mxu0 0
  %2040 = vmatpush1.bf16.msra.mxu0 %v1995
  %2041 = vmatprep.subr.bf16.mxu0 0
  %2042 = vmatpush1.bf16.msra.mxu0 %v1996
  %2043 = vmatprep.subr.bf16.mxu0 0
  %2044 = vmatpush1.bf16.msra.mxu0 %v1997
  %2045 = vmatprep.subr.bf16.mxu0 0
  %2046 = vmatpush1.bf16.msra.mxu0 %v1998
  %2047 = vmatprep.mubr.bf16.mxu0 %v1865
  %2048 = vmatmul.mubr.bf16.gmra.mrb[0].mxu0 %v1864
  %v2049 = vpop.f32.mrb[0].mxu0
  %v2050 = vadd.f32 %v1917, %v2049
  %v2051 = vpop.f32.mrb[0].mxu0
  %v2052 = vpop.f32.mrb[0].mxu0
  %v2053 = vadd.f32 %v1917, %v2052
  %v2054 = vpop.f32.mrb[0].mxu0
  %2055 = vmatprep.mubr.bf16.mxu0 %v1867
  %2056 = vmatmul.mubr.bf16.gmra.mrb[0].mxu0 %v1866
  %v2057 = vpop.f32.mrb[0].mxu0
  %v2058 = vadd.f32 %v1917, %v2057
  %v2059 = vpop.f32.mrb[0].mxu0
  %v2060 = vpop.f32.mrb[0].mxu0
  %v2061 = vadd.f32 %v1917, %v2060
  %v2062 = vpop.f32.mrb[0].mxu0
  %2063 = vmatprep.mubr.bf16.mxu0 %v1869
  %2064 = vmatmul.mubr.bf16.gmra.mrb[0].mxu0 %v1868
  %v2065 = vpop.f32.mrb[0].mxu0
  %v2066 = vadd.f32 %v1917, %v2065
  %v2067 = vpop.f32.mrb[0].mxu0
  %v2068 = vpop.f32.mrb[0].mxu0
  %v2069 = vadd.f32 %v1917, %v2068
  %v2070 = vpop.f32.mrb[0].mxu0
  %2071 = vmatprep.mubr.bf16.mxu0 %v1871
  %2072 = vmatmul.mubr.bf16.gmra.mrb[0].mxu0 %v1870
  %v2073 = vpop.f32.mrb[0].mxu0
  %v2074 = vadd.f32 %v1917, %v2073
  %v2075 = vpop.f32.mrb[0].mxu0
  %v2076 = vpop.f32.mrb[0].mxu0
  %v2077 = vadd.f32 %v1917, %v2076
  %v2078 = vpop.f32.mrb[0].mxu0
  %2079 = vmatprep.mubr.bf16.mxu0 %v1873
  %2080 = vmatmul.mubr.bf16.gmra.mrb[0].mxu0 %v1872
  %v2081 = vpop.f32.mrb[0].mxu0
  %v2082 = vadd.f32 %v1917, %v2081
  %v2083 = vpop.f32.mrb[0].mxu0
  %v2084 = vpop.f32.mrb[0].mxu0
  %v2085 = vadd.f32 %v1917, %v2084
  %v2086 = vpop.f32.mrb[0].mxu0
  %2087 = vmatprep.mubr.bf16.mxu0 %v1875
  %2088 = vmatmul.mubr.bf16.gmra.mrb[0].mxu0 %v1874
  %v2089 = vpop.f32.mrb[0].mxu0
  %v2090 = vadd.f32 %v1917, %v2089
  %v2091 = vpop.f32.mrb[0].mxu0
  %v2092 = vpop.f32.mrb[0].mxu0
  %v2093 = vadd.f32 %v1917, %v2092
  %v2094 = vpop.f32.mrb[0].mxu0
  %2095 = vmatprep.mubr.bf16.mxu0 %v1877
  %2096 = vmatmul.mubr.bf16.gmra.mrb[0].mxu0 %v1876
  %v2097 = vpop.f32.mrb[0].mxu0
  %v2098 = vadd.f32 %v1917, %v2097
  %v2099 = vpop.f32.mrb[0].mxu0
  %v2100 = vpop.f32.mrb[0].mxu0
  %v2101 = vadd.f32 %v1917, %v2100
  %v2102 = vpop.f32.mrb[0].mxu0
  %2103 = vmatprep.mubr.bf16.mxu0 %v1879
  %2104 = vmatmul.mubr.bf16.gmra.mrb[0].mxu0 %v1878
  %v2105 = vpop.f32.mrb[0].mxu0
  %v2106 = vadd.f32 %v1917, %v2105
  %v2107 = vpop.f32.mrb[0].mxu0
  %v2108 = vpop.f32.mrb[0].mxu0
  %v2109 = vadd.f32 %v1917, %v2108
  %v2110 = vpop.f32.mrb[0].mxu0
  %2111 = vdwg.mxu0
  %v2112 = vmax.f32 %v2050, 0.0
  %v2113 = vmax.f32 %v2053, 0.0
  %v2114 = vmax.f32 %v2058, 0.0
  %v2115 = vmax.f32 %v2061, 0.0
  %v2116 = vmax.f32 %v2066, 0.0
  %v2117 = vmax.f32 %v2069, 0.0
  %v2118 = vmax.f32 %v2074, 0.0
  %v2119 = vmax.f32 %v2077, 0.0
  %v2120 = vmax.f32 %v2082, 0.0
  %v2121 = vmax.f32 %v2085, 0.0
  %v2122 = vmax.f32 %v2090, 0.0
  %v2123 = vmax.f32 %v2093, 0.0
  %v2124 = vmax.f32 %v2098, 0.0
  %v2125 = vmax.f32 %v2101, 0.0
  %v2126 = vmax.f32 %v2106, 0.0
  %v2127 = vmax.f32 %v2109, 0.0
  %v2128 = vpack.c.bf16 %v2113, %v2112
  %v2129 = vpack.c.bf16 %v2115, %v2114
  %v2130 = vpack.c.bf16 %v2117, %v2116
  %v2131 = vpack.c.bf16 %v2119, %v2118
  %v2132 = vpack.c.bf16 %v2121, %v2120
  %v2133 = vpack.c.bf16 %v2123, %v2122
  %v2134 = vpack.c.bf16 %v2125, %v2124
  %v2135 = vpack.c.bf16 %v2127, %v2126
  %2136 = vst [vmem:[#allocation3] sm:$0xff] %v2128
  %2137 = vst [vmem:[#allocation3 + $0x8] sm:$0xff] %v2129
  %2138 = vst [vmem:[#allocation3 + $0x10] sm:$0xff] %v2130
  %2139 = vst [vmem:[#allocation3 + $0x18] sm:$0xff] %v2131
  %2140 = vst [vmem:[#allocation3 + $0x20] sm:$0xff] %v2132
  %2141 = vst [vmem:[#allocation3 + $0x28] sm:$0xff] %v2133
  %2142 = vst [vmem:[#allocation3 + $0x30] sm:$0xff] %v2134
  %2143 = vst [vmem:[#allocation3 + $0x38] sm:$0xff] %v2135
  %v2144 = vld [vmem:[%s6] sm:$0xff]
  %v2145 = vld [vmem:[%s6 + $0x8] sm:$0xff]
  %v2146 = vld [vmem:[%s3] sm:$0xf]
  %v2147 = vld [vmem:[%s3 + $0x4] sm:$0xf]
  %v2148 = vld [vmem:[#allocation3] sm:$0xff]
  %v2149 = vld [vmem:[#allocation3 + $0x8] sm:$0xff]
  %v2150 = vld [vmem:[#allocation3 + $0x10] sm:$0xff]
  %v2151 = vld [vmem:[#allocation3 + $0x18] sm:$0xff]
  %v2152 = vld [vmem:[#allocation3 + $0x20] sm:$0xff]
  %v2153 = vld [vmem:[#allocation3 + $0x28] sm:$0xff]
  %v2154 = vld [vmem:[#allocation3 + $0x30] sm:$0xff]
  %v2155 = vld [vmem:[#allocation3 + $0x38] sm:$0xff]
  %v2158 = vunpack.c.l.b16 %v2146
  %v2159 = vunpack.c.l.b16 %v2147
  %v2160 = vpack.c.b16 %v2159, %v2158
  %2162 = vmatprep.subr.bf16.mxu0 0
  %2163 = vmatpush1.bf16.msra.mxu0 %v2148
  %2164 = vmatprep.subr.bf16.mxu0 0
  %2165 = vmatpush1.bf16.msra.mxu0 %v2149
  %2166 = vmatprep.subr.bf16.mxu0 0
  %2167 = vmatpush1.bf16.msra.mxu0 %v2150
  %2168 = vmatprep.subr.bf16.mxu0 0
  %2169 = vmatpush1.bf16.msra.mxu0 %v2151
  %2170 = vmatprep.subr.bf16.mxu0 0
  %2171 = vmatpush1.bf16.msra.mxu0 %v2152
  %2172 = vmatprep.subr.bf16.mxu0 0
  %2173 = vmatpush1.bf16.msra.mxu0 %v2153
  %2174 = vmatprep.subr.bf16.mxu0 0
  %2175 = vmatpush1.bf16.msra.mxu0 %v2154
  %2176 = vmatprep.subr.bf16.mxu0 0
  %2177 = vmatpush1.bf16.msra.mxu0 %v2155
  %2178 = vmatprep.subr.bf16.mxu0 0
  %2179 = vmatpush1.bf16.msra.mxu0 0
  %2180 = vmatprep.subr.bf16.mxu0 0
  %2181 = vmatpush1.bf16.msra.mxu0 0
  %2182 = vmatprep.subr.bf16.mxu0 0
  %2183 = vmatpush1.bf16.msra.mxu0 0
  %2184 = vmatprep.subr.bf16.mxu0 0
  %2185 = vmatpush1.bf16.msra.mxu0 0
  %2186 = vmatprep.subr.bf16.mxu0 0
  %2187 = vmatpush1.bf16.msra.mxu0 0
  %2188 = vmatprep.subr.bf16.mxu0 0
  %2189 = vmatpush1.bf16.msra.mxu0 0
  %2190 = vmatprep.subr.bf16.mxu0 0
  %2191 = vmatpush1.bf16.msra.mxu0 0
  %2192 = vmatprep.subr.bf16.mxu0 0
  %2193 = vmatpush1.bf16.msra.mxu0 0
  %2194 = vmatprep.mubr.bf16.mxu0 0
  %2195 = vmatmul.mubr.bf16.gmra.mrb[0].mxu0 %v2160
  %v2196 = vpop.f32.mrb[0].mxu0
  %v2197 = vadd.f32 0.0, %v2196
  %v2198 = vpop.f32.mrb[0].mxu0
  %v2199 = vpop.f32.mrb[0].mxu0
  %v2200 = vadd.f32 0.0, %v2199
  %v2201 = vpop.f32.mrb[0].mxu0
  %2202 = vdwg.mxu0
  %2204 = vset.pattern.permute.xlu0 0
  %2205 = vperm.xlu0 %2204, %v2144
  %v2206 = vpop.permute.xlu0 %2205
  %2209 = vset.pattern.permute.xlu0 0
  %2210 = vperm.xlu0 %2209, %v2145
  %v2211 = vpop.permute.xlu0 %2210
  %v2213 = vmul.f32 %v2197, %v2206
  %v2214 = vmul.f32 %v2200, %v2211
  %v2215 = vld [vmem:[#allocation3] sm:$0xff]
  %2216 = vst [vmem:[#allocation5] sm:$0xff] %v2215
  %v2217 = vpack.c.bf16 %v2214, %v2213
  %2218 = vst [vmem:[#allocation5 + $0x8] sm:$0xff] %v2217
  %v2219 = vld [vmem:[#allocation5] sm:$0xff]
  %v2220 = vld [vmem:[#allocation5 + $0x8] sm:$0xff]
  %v2221 = vld [vmem:[%s9] sm:$0xf]
  %v2222 = vld [vmem:[%s9 + $0x4] sm:$0xf]
  %v2223 = vld [vmem:[%s9 + $0x8] sm:$0xf]
  %v2224 = vld [vmem:[%s9 + $0xc] sm:$0xf]
  %v2225 = vld [vmem:[%s9 + $0x10] sm:$0xf]
  %v2226 = vld [vmem:[%s9 + $0x14] sm:$0xf]
  %v2227 = vld [vmem:[%s9 + $0x18] sm:$0xf]
  %v2228 = vld [vmem:[%s9 + $0x1c] sm:$0xf]
  %v2229 = vld [vmem:[%s9 + $0x20] sm:$0xf]
  %v2230 = vld [vmem:[%s9 + $0x24] sm:$0xf]
  %v2231 = vld [vmem:[%s9 + $0x28] sm:$0xf]
  %v2232 = vld [vmem:[%s9 + $0x2c] sm:$0xf]
  %v2233 = vld [vmem:[%s9 + $0x30] sm:$0xf]
  %v2234 = vld [vmem:[%s9 + $0x34] sm:$0xf]
  %v2235 = vld [vmem:[%s9 + $0x38] sm:$0xf]
  %v2236 = vld [vmem:[%s9 + $0x3c] sm:$0xf]
  %v2237 = vld [vmem:[%s9 + $0x40] sm:$0xf]
  %v2238 = vld [vmem:[%s9 + $0x44] sm:$0xf]
  %v2239 = vld [vmem:[%s9 + $0x48] sm:$0xf]
  %v2240 = vld [vmem:[%s9 + $0x4c] sm:$0xf]
  %v2241 = vld [vmem:[%s9 + $0x50] sm:$0xf]
  %v2242 = vld [vmem:[%s9 + $0x54] sm:$0xf]
  %v2243 = vld [vmem:[%s9 + $0x58] sm:$0xf]
  %v2244 = vld [vmem:[%s9 + $0x5c] sm:$0xf]
  %v2245 = vld [vmem:[%s9 + $0x60] sm:$0xf]
  %v2246 = vld [vmem:[%s9 + $0x64] sm:$0xf]
  %v2247 = vld [vmem:[%s9 + $0x68] sm:$0xf]
  %v2248 = vld [vmem:[%s9 + $0x6c] sm:$0xf]
  %v2249 = vld [vmem:[%s9 + $0x70] sm:$0xf]
  %v2250 = vld [vmem:[%s9 + $0x74] sm:$0xf]
  %v2251 = vld [vmem:[%s9 + $0x78] sm:$0xf]
  %v2252 = vld [vmem:[%s9 + $0x7c] sm:$0xf]
  %v2253 = vld [vmem:[%s12] sm:$0x1]
  %v2255 = vlaneseq
  %v2256 = vshrl.u32 %v2255, 7
  %v2257 = vsub.s32 0, %v2256
  %v2258 = vrot.slane %v2253, %v2257
  %v2292 = vunpack.c.l.b16 %v2221
  %v2293 = vunpack.c.l.b16 %v2222
  %v2294 = vunpack.c.l.b16 %v2223
  %v2295 = vunpack.c.l.b16 %v2224
  %v2296 = vunpack.c.l.b16 %v2225
  %v2297 = vunpack.c.l.b16 %v2226
  %v2298 = vunpack.c.l.b16 %v2227
  %v2299 = vunpack.c.l.b16 %v2228
  %v2300 = vunpack.c.l.b16 %v2229
  %v2301 = vunpack.c.l.b16 %v2230
  %v2302 = vunpack.c.l.b16 %v2231
  %v2303 = vunpack.c.l.b16 %v2232
  %v2304 = vunpack.c.l.b16 %v2233
  %v2305 = vunpack.c.l.b16 %v2234
  %v2306 = vunpack.c.l.b16 %v2235
  %v2307 = vunpack.c.l.b16 %v2236
  %v2308 = vunpack.c.l.b16 %v2237
  %v2309 = vunpack.c.l.b16 %v2238
  %v2310 = vunpack.c.l.b16 %v2239
  %v2311 = vunpack.c.l.b16 %v2240
  %v2312 = vunpack.c.l.b16 %v2241
  %v2313 = vunpack.c.l.b16 %v2242
  %v2314 = vunpack.c.l.b16 %v2243
  %v2315 = vunpack.c.l.b16 %v2244
  %v2316 = vunpack.c.l.b16 %v2245
  %v2317 = vunpack.c.l.b16 %v2246
  %v2318 = vunpack.c.l.b16 %v2247
  %v2319 = vunpack.c.l.b16 %v2248
  %v2320 = vunpack.c.l.b16 %v2249
  %v2321 = vunpack.c.l.b16 %v2250
  %v2322 = vunpack.c.l.b16 %v2251
  %v2323 = vunpack.c.l.b16 %v2252
  %v2324 = vpack.c.b16 %v2293, %v2292
  %v2325 = vpack.c.b16 %v2295, %v2294
  %v2326 = vpack.c.b16 %v2297, %v2296
  %v2327 = vpack.c.b16 %v2299, %v2298
  %v2328 = vpack.c.b16 %v2301, %v2300
  %v2329 = vpack.c.b16 %v2303, %v2302
  %v2330 = vpack.c.b16 %v2305, %v2304
  %v2331 = vpack.c.b16 %v2307, %v2306
  %v2332 = vpack.c.b16 %v2309, %v2308
  %v2333 = vpack.c.b16 %v2311, %v2310
  %v2334 = vpack.c.b16 %v2313, %v2312
  %v2335 = vpack.c.b16 %v2315, %v2314
  %v2336 = vpack.c.b16 %v2317, %v2316
  %v2337 = vpack.c.b16 %v2319, %v2318
  %v2338 = vpack.c.b16 %v2321, %v2320
  %v2339 = vpack.c.b16 %v2323, %v2322
  %2356 = vmatprep.subr.bf16.mxu0 0
  %2357 = vmatpush1.bf16.msra.mxu0 %v2324
  %2358 = vmatprep.subr.bf16.mxu0 0
  %2359 = vmatpush1.bf16.msra.mxu0 %v2325
  %2360 = vmatprep.subr.bf16.mxu0 0
  %2361 = vmatpush1.bf16.msra.mxu0 %v2326
  %2362 = vmatprep.subr.bf16.mxu0 0
  %2363 = vmatpush1.bf16.msra.mxu0 %v2327
  %2364 = vmatprep.subr.bf16.mxu0 0
  %2365 = vmatpush1.bf16.msra.mxu0 %v2328
  %2366 = vmatprep.subr.bf16.mxu0 0
  %2367 = vmatpush1.bf16.msra.mxu0 %v2329
  %2368 = vmatprep.subr.bf16.mxu0 0
  %2369 = vmatpush1.bf16.msra.mxu0 %v2330
  %2370 = vmatprep.subr.bf16.mxu0 0
  %2371 = vmatpush1.bf16.msra.mxu0 %v2331
  %2372 = vmatprep.subr.bf16.mxu0 0
  %2373 = vmatpush1.bf16.msra.mxu0 %v2332
  %2374 = vmatprep.subr.bf16.mxu0 0
  %2375 = vmatpush1.bf16.msra.mxu0 %v2333
  %2376 = vmatprep.subr.bf16.mxu0 0
  %2377 = vmatpush1.bf16.msra.mxu0 %v2334
  %2378 = vmatprep.subr.bf16.mxu0 0
  %2379 = vmatpush1.bf16.msra.mxu0 %v2335
  %2380 = vmatprep.subr.bf16.mxu0 0
  %2381 = vmatpush1.bf16.msra.mxu0 %v2336
  %2382 = vmatprep.subr.bf16.mxu0 0
  %2383 = vmatpush1.bf16.msra.mxu0 %v2337
  %2384 = vmatprep.subr.bf16.mxu0 0
  %2385 = vmatpush1.bf16.msra.mxu0 %v2338
  %2386 = vmatprep.subr.bf16.mxu0 0
  %2387 = vmatpush1.bf16.msra.mxu0 %v2339
  %2388 = vmatprep.mubr.bf16.mxu0 %v2220
  %2389 = vmatmul.mubr.bf16.gmra.mrb[0].mxu0 %v2219
  %v2390 = vpop.f32.mrb[0].mxu0
  %v2391 = vadd.f32 %v2258, %v2390
  %v2392 = vpop.f32.mrb[0].mxu0
  %v2393 = vpop.f32.mrb[0].mxu0
  %v2394 = vadd.f32 %v2258, %v2393
  %v2395 = vpop.f32.mrb[0].mxu0
  %2396 = vdwg.mxu0
  %2397 = vst [vmem:[%s13] sm:$0xff] %v2391
  %2398 = vst [vmem:[%s13 + $0x8] sm:$0xff] %v2394
  // Predicated region
  $region54: #{sage_forward.1} parent=0 // pred_check
    _
  $region55: #{sage_forward.1} parent=0 // pred_check_branch
    %2400 = sbr.rel (0) target = $region57
  $region56: #{sage_forward.1} parent=0 // pred_region
    _
  $region57: #{sage_forward.1} parent=0 // pred_fallthru
    _
  // Predicated region
  $region58: #{sage_forward.1} parent=0 // pred_check
    _
  $region59: #{sage_forward.1} parent=0 // pred_check_branch
    %2402 = sbr.rel (0) target = $region61
  $region60: #{sage_forward.1} parent=0 // pred_region
    _
  $region61: #{sage_forward.1} parent=0 // pred_fallthru
    _

</llo_original>
